<compile_context>
chip_gen: v7x
topology: tpu7x:2x2x1
jax: 0.10.0
libtpu: 0.0.40
codegen_flags: <defaults>
</compile_context>

<pallas_src>
import jax
import jax.numpy as jnp
from jax import lax
from jax.experimental import pallas as pl
from jax.experimental.pallas import tpu as pltpu

# Hyperparameters (stand-ins for the module's globals).
WORD_EMB_DIM = 32        # word_embedding_dimension
SPEECH_EMB_DIM = 16      # speech_embedding_dimension
HIDDEN = 32              # hidden_unit_dimension
LSTM_LAYER = 1           # single bidirectional layer
VOCAB_SIZE = 50
SPEECH_TAG_SIZE = 12
TAGSET_SIZE = 8
SEQ_LEN = 8

D_IN = WORD_EMB_DIM + SPEECH_EMB_DIM   # 48
D2 = 2 * D_IN                          # 96   [emb[t] | emb[T-1-t]] combined input
G = 4 * HIDDEN                         # 128  per-direction gate width
G2 = 2 * G                             # 256  both directions, interleaved by gate
H2 = 2 * HIDDEN                        # 64   combined [h_fwd | h_bwd] state
OUT_PAD = 128                          # lane-dense padded tag width
NEG = -1e30                            # "minus infinity" bias for padded tag lanes
B_TILE = 8                             # per-grid-step batch tile (demo-small; >=128 in prod)


def bilstm_kernel(emb2_ref, win_ref, bin_ref, wrec_ref, wout_ref, bout_ref, out_ref):
    # emb2_ref: (T, BT, 2*D_IN) time-major block; out_ref: (T, BT, OUT_PAD)
    T, BT, _ = emb2_ref.shape
    H = HIDDEN

    # One fused input projection for BOTH directions (forward input at t in the
    # first D_IN features, backward input (time-reversed) in the second D_IN).
    e = emb2_ref[...].reshape(T * BT, D2)
    xs = (jnp.dot(e, win_ref[...], preferred_element_type=jnp.float32)
          + bin_ref[...])                                        # (T*BT, 2G)

    wrec = wrec_ref[...]                                         # (2H, 2G) block-diag

    h = jnp.zeros((BT, H2), jnp.float32)                         # [h_f | h_b]
    c = jnp.zeros((BT, H2), jnp.float32)
    hs = []                                                      # per-step h, in vregs

    # Fused, fully-unrolled recurrence: iteration k advances the forward chain
    # at time k and the backward chain at time T-1-k through ONE (BT,64)@(64,256)
    # MXU matmul.  Gate columns are [i_f,i_b | f_f,f_b | o_f,o_b | g_f,g_b].
    for k in range(T):
        gates = (jnp.dot(h, wrec, preferred_element_type=jnp.float32)
                 + xs[k * BT:(k + 1) * BT, :])                   # (BT, 2G)
        sgm = jax.nn.sigmoid(gates[:, 0:3 * H2])                 # one EUP pass: i,f,o
        i = sgm[:, 0 * H2:1 * H2]
        f = sgm[:, 1 * H2:2 * H2]
        o = sgm[:, 2 * H2:3 * H2]
        g = jnp.tanh(gates[:, 3 * H2:4 * H2])                    # one EUP pass: g
        c = f * c + i * g                                        # (BT, 2H)
        h = o * jnp.tanh(c)
        hs.append(h)

    # Assemble the combined hidden history (off the serial chain, no masked
    # per-step scratch stores): forward half in natural time order, backward
    # half reversed back to natural order, lane-concatenated to (T*BT, 2H).
    hf = jnp.concatenate([hs[k][:, 0:H] for k in range(T)], axis=0)          # (T*BT, H)
    hb = jnp.concatenate([hs[T - 1 - k][:, H:H2] for k in range(T)], axis=0)  # (T*BT, H)
    hall = jnp.concatenate([hf, hb], axis=-1)                                # (T*BT, 2H)

    # Single merged hidden2tag matmul (K=64) then exact log_softmax over the
    # 128-lane padded tag space (padded lanes carry a -1e30 bias -> exp == 0).
    tag = (jnp.dot(hall, wout_ref[...], preferred_element_type=jnp.float32)
           + bout_ref[...])                                      # (T*BT, 128)
    m = jnp.max(tag, axis=1, keepdims=True)
    lse = jnp.log(jnp.sum(jnp.exp(tag - m), axis=1, keepdims=True)) + m
    out_ref[...] = (tag - lse).reshape(T, BT, OUT_PAD)           # lane-dense store


def pack_params(p):
    """Host-side repack of PyTorch-layout LSTM/Linear params into kernel layout."""
    H = HIDDEN
    # PyTorch gate-row order is [i, f, g, o]; kernel column order is [i, f, o, g]
    # (sigmoid gates contiguous, tanh gate last).
    src_gate = [0, 1, 3, 2]
    wihT_f = p['wih_f'].T          # (D_IN, 4H)
    wihT_b = p['wih_b'].T
    whhT_f = p['whh_f'].T          # (H, 4H)
    whhT_b = p['whh_b'].T

    win = jnp.zeros((D2, G2), jnp.float32)      # combined input weights
    bin_ = jnp.zeros((1, G2), jnp.float32)      # combined (pre-summed) biases
    wrec = jnp.zeros((H2, G2), jnp.float32)     # block-diagonal recurrent weights
    for j, gt in enumerate(src_gate):
        src = slice(gt * H, (gt + 1) * H)
        dst_f = slice(j * 2 * H, j * 2 * H + H)
        dst_b = slice(j * 2 * H + H, (j + 1) * 2 * H)
        win = win.at[0:D_IN, dst_f].set(wihT_f[:, src])
        win = win.at[D_IN:D2, dst_b].set(wihT_b[:, src])
        bin_ = bin_.at[:, dst_f].set(p['bias_f'][:, src])
        bin_ = bin_.at[:, dst_b].set(p['bias_b'][:, src])
        wrec = wrec.at[0:H, dst_f].set(whhT_f[:, src])     # fwd block
        wrec = wrec.at[H:H2, dst_b].set(whhT_b[:, src])    # bwd block

    wout = jnp.zeros((H2, OUT_PAD), jnp.float32).at[:, :TAGSET_SIZE].set(p['wout'].T)
    bout = jnp.full((1, OUT_PAD), NEG, jnp.float32).at[:, :TAGSET_SIZE].set(p['bout'])

    return dict(win=win, bin=bin_, wrec=wrec, wout=wout, bout=bout)


def bilstm_forward(embeds, packed, *, b_tile=B_TILE):
    """embeds: (B, T, D_IN) float32; returns (B, T, TAGSET_SIZE) log-probs."""
    B, T, _ = embeds.shape
    assert T == SEQ_LEN, "kernel is unrolled for T == SEQ_LEN"
    assert b_tile % 8 == 0 and B % b_tile == 0, "batch tile must fill f32 sublanes"

    # Glue (layout only): time-major, with the time-reversed copy appended along
    # features so ONE matmul projects both directions' inputs.
    e_tm = jnp.transpose(embeds, (1, 0, 2))                 # (T, B, D_IN)
    emb2 = jnp.concatenate([e_tm, e_tm[::-1]], axis=-1)     # (T, B, 2*D_IN)

    out_pad = pl.pallas_call(
        bilstm_kernel,
        out_shape=jax.ShapeDtypeStruct((T, B, OUT_PAD), jnp.float32),
        grid_spec=pltpu.PrefetchScalarGridSpec(
            num_scalar_prefetch=0,
            grid=(B // b_tile,),
            in_specs=[
                pl.BlockSpec((T, b_tile, D2), lambda b: (0, b, 0)),
                pl.BlockSpec((D2, G2), lambda b: (0, 0)),
                pl.BlockSpec((1, G2), lambda b: (0, 0)),
                pl.BlockSpec((H2, G2), lambda b: (0, 0)),
                pl.BlockSpec((H2, OUT_PAD), lambda b: (0, 0)),
                pl.BlockSpec((1, OUT_PAD), lambda b: (0, 0)),
            ],
            out_specs=pl.BlockSpec((T, b_tile, OUT_PAD), lambda b: (0, b, 0)),
        ),
        compiler_params=pltpu.CompilerParams(
            dimension_semantics=("parallel",)),   # v7x: 2 TCs each take half the batch
    )(emb2, packed['win'], packed['bin'], packed['wrec'],
      packed['wout'], packed['bout'])

    # Back to batch-major, drop padded tag lanes.
    return jnp.transpose(out_pad, (1, 0, 2))[:, :, :TAGSET_SIZE]


def ref_forward(embeds, p):
    """Pure-JAX reference matching torch.nn.LSTM(bidirectional) + Linear + log_softmax
    for a single (T, D_IN) sentence."""
    H = HIDDEN

    def run(wih, whh, bias, reverse):
        xp = embeds @ wih.T + bias[0]                  # (T, 4H)

        def step(carry, x):
            h, c = carry
            gates = x + h @ whh.T
            i = jax.nn.sigmoid(gates[0:H])
            f = jax.nn.sigmoid(gates[H:2 * H])
            g = jnp.tanh(gates[2 * H:3 * H])
            o = jax.nn.sigmoid(gates[3 * H:4 * H])
            c = f * c + i * g
            h = o * jnp.tanh(c)
            return (h, c), h

        init = (jnp.zeros(H, jnp.float32), jnp.zeros(H, jnp.float32))
        _, hsq = lax.scan(step, init, xp, reverse=reverse)
        return hsq

    hf = run(p['wih_f'], p['whh_f'], p['bias_f'], False)
    hb = run(p['wih_b'], p['whh_b'], p['bias_b'], True)
    hcat = jnp.concatenate([hf, hb], axis=1)
    tag = hcat @ p['wout'].T + p['bout'][0]
    return jax.nn.log_softmax(tag, axis=1)


if __name__ == "__main__":
    key = jax.random.PRNGKey(0)
    ks = jax.random.split(key, 12)
    s = 0.1
    B = 16   # small demo batch; production should use B_TILE >= 128 per grid step

    # Deterministic synthetic parameters (shapes follow the module's __init__;
    # biases are the pre-summed b_ih + b_hh).
    word_table = s * jax.random.normal(ks[0], (VOCAB_SIZE, WORD_EMB_DIM), jnp.float32)
    speech_table = s * jax.random.normal(ks[1], (SPEECH_TAG_SIZE, SPEECH_EMB_DIM), jnp.float32)
    params = {
        'wih_f': s * jax.random.normal(ks[2], (G, D_IN), jnp.float32),
        'whh_f': s * jax.random.normal(ks[3], (G, HIDDEN), jnp.float32),
        'bias_f': s * jax.random.normal(ks[4], (1, G), jnp.float32),
        'wih_b': s * jax.random.normal(ks[5], (G, D_IN), jnp.float32),
        'whh_b': s * jax.random.normal(ks[6], (G, HIDDEN), jnp.float32),
        'bias_b': s * jax.random.normal(ks[7], (1, G), jnp.float32),
        'wout': s * jax.random.normal(ks[8], (TAGSET_SIZE, 2 * HIDDEN), jnp.float32),
        'bout': s * jax.random.normal(ks[9], (1, TAGSET_SIZE), jnp.float32),
    }
    packed = pack_params(params)

    # Inputs: a batch of token-index / POS-tag-index sequences of length SEQ_LEN.
    sentences = jax.random.randint(ks[10], (B, SEQ_LEN), 0, VOCAB_SIZE)
    speech_tags = jax.random.randint(ks[11], (B, SEQ_LEN), 0, SPEECH_TAG_SIZE)

    # Embedding lookups + concat are glue (gather) in plain JAX.
    word_embeds = word_table[sentences]            # (B, T, WORD_EMB_DIM)
    speech_embeds = speech_table[speech_tags]      # (B, T, SPEECH_EMB_DIM)
    embeds = jnp.concatenate([word_embeds, speech_embeds], axis=-1).astype(jnp.float32)

    out = bilstm_forward(embeds, packed, b_tile=B_TILE)
    out = jax.block_until_ready(out)

    ref = jax.vmap(lambda e: ref_forward(e, params))(embeds)
    assert out.shape == (B, SEQ_LEN, TAGSET_SIZE)
    assert jnp.allclose(out, ref, atol=1e-4, rtol=1e-4), "kernel/reference mismatch"

    print("KERNEL_OK")
</pallas_src>

<mosaic_0001>
module attributes {stable_mosaic.version = 11 : i64} {
  func.func @bilstm_kernel(%arg0: i32, %arg1: memref<8x8x96xf32, #tpu.memory_space<vmem>>, %arg2: memref<96x256xf32, #tpu.memory_space<vmem>>, %arg3: memref<1x256xf32, #tpu.memory_space<vmem>>, %arg4: memref<64x256xf32, #tpu.memory_space<vmem>>, %arg5: memref<64x128xf32, #tpu.memory_space<vmem>>, %arg6: memref<1x128xf32, #tpu.memory_space<vmem>>, %arg7: memref<8x8x128xf32, #tpu.memory_space<vmem>>) attributes {dimension_semantics = [#tpu.dimension_semantics<parallel>], iteration_bounds = array<i64: 2>, scalar_prefetch = 0 : i64, scratch_operands = 0 : i64, tpu.core_type = #tpu.core_type<tc>, window_params = [{transform_indices = @transform_0, window_bounds = array<i64: 8, 8, 96>}, {pipeline_mode = #tpu.pipeline_mode<synchronous>, transform_indices = @transform_1, window_bounds = array<i64: 96, 256>}, {pipeline_mode = #tpu.pipeline_mode<synchronous>, transform_indices = @transform_2, window_bounds = array<i64: 1, 256>}, {pipeline_mode = #tpu.pipeline_mode<synchronous>, transform_indices = @transform_3, window_bounds = array<i64: 64, 256>}, {pipeline_mode = #tpu.pipeline_mode<synchronous>, transform_indices = @transform_4, window_bounds = array<i64: 64, 128>}, {pipeline_mode = #tpu.pipeline_mode<synchronous>, transform_indices = @transform_5, window_bounds = array<i64: 1, 128>}, {transform_indices = @transform_6, window_bounds = array<i64: 8, 8, 128>}]} {
    %c0 = arith.constant 0 : index
    %c0_0 = arith.constant 0 : index
    %c0_1 = arith.constant 0 : index
    %0 = vector.load %arg1[%c0, %c0_0, %c0_1] : memref<8x8x96xf32, #tpu.memory_space<vmem>>, vector<8x8x96xf32>
    %1 = vector.shape_cast %0 : vector<8x8x96xf32> to vector<64x96xf32>
    %c0_2 = arith.constant 0 : index
    %c0_3 = arith.constant 0 : index
    %2 = vector.load %arg2[%c0_2, %c0_3] : memref<96x256xf32, #tpu.memory_space<vmem>>, vector<96x256xf32>
    %cst = arith.constant dense<0.000000e+00> : vector<64x256xf32>
    %3 = tpu.matmul %1, %2, %cst {dimension_numbers = #tpu.dot_dimension_numbers<[1], [0], [0], [1], [0, 0, 1, 1], [], []>} : vector<64x96xf32>, vector<96x256xf32>, vector<64x256xf32> -> vector<64x256xf32>
    %c0_4 = arith.constant 0 : index
    %c0_5 = arith.constant 0 : index
    %4 = vector.load %arg3[%c0_4, %c0_5] : memref<1x256xf32, #tpu.memory_space<vmem>>, vector<1x256xf32>
    %5 = vector.broadcast %4 : vector<1x256xf32> to vector<64x256xf32>
    %6 = arith.addf %3, %5 : vector<64x256xf32>
    %c0_6 = arith.constant 0 : index
    %c0_7 = arith.constant 0 : index
    %7 = vector.load %arg4[%c0_6, %c0_7] : memref<64x256xf32, #tpu.memory_space<vmem>>, vector<64x256xf32>
    %cst_8 = arith.constant 0.000000e+00 : f32
    %8 = vector.broadcast %cst_8 : f32 to vector<8x64xf32>
    %cst_9 = arith.constant 0.000000e+00 : f32
    %9 = vector.broadcast %cst_9 : f32 to vector<8x64xf32>
    %cst_10 = arith.constant dense<0.000000e+00> : vector<8x256xf32>
    %10 = tpu.matmul %8, %7, %cst_10 {dimension_numbers = #tpu.dot_dimension_numbers<[1], [0], [0], [1], [0, 0, 1, 1], [], []>} : vector<8x64xf32>, vector<64x256xf32>, vector<8x256xf32> -> vector<8x256xf32>
    %11 = vector.extract_strided_slice %6 {offsets = [0, 0], sizes = [8, 256], strides = [1, 1]} : vector<64x256xf32> to vector<8x256xf32>
    %12 = arith.addf %10, %11 : vector<8x256xf32>
    %13 = vector.extract_strided_slice %12 {offsets = [0, 0], sizes = [8, 192], strides = [1, 1]} : vector<8x256xf32> to vector<8x192xf32>
    %14 = arith.negf %13 : vector<8x192xf32>
    %15 = math.exp %14 : vector<8x192xf32>
    %cst_11 = arith.constant 1.000000e+00 : f32
    %16 = vector.broadcast %cst_11 : f32 to vector<8x192xf32>
    %17 = arith.addf %16, %15 : vector<8x192xf32>
    %18 = arith.divf %16, %17 : vector<8x192xf32>
    %19 = vector.extract_strided_slice %18 {offsets = [0, 0], sizes = [8, 64], strides = [1, 1]} : vector<8x192xf32> to vector<8x64xf32>
    %20 = vector.extract_strided_slice %18 {offsets = [0, 64], sizes = [8, 64], strides = [1, 1]} : vector<8x192xf32> to vector<8x64xf32>
    %21 = vector.extract_strided_slice %18 {offsets = [0, 128], sizes = [8, 64], strides = [1, 1]} : vector<8x192xf32> to vector<8x64xf32>
    %22 = vector.extract_strided_slice %12 {offsets = [0, 192], sizes = [8, 64], strides = [1, 1]} : vector<8x256xf32> to vector<8x64xf32>
    %23 = math.tanh %22 : vector<8x64xf32>
    %24 = arith.mulf %20, %9 : vector<8x64xf32>
    %25 = arith.mulf %19, %23 : vector<8x64xf32>
    %26 = arith.addf %24, %25 : vector<8x64xf32>
    %27 = math.tanh %26 : vector<8x64xf32>
    %28 = arith.mulf %21, %27 : vector<8x64xf32>
    %cst_12 = arith.constant dense<0.000000e+00> : vector<8x256xf32>
    %29 = tpu.matmul %28, %7, %cst_12 {dimension_numbers = #tpu.dot_dimension_numbers<[1], [0], [0], [1], [0, 0, 1, 1], [], []>} : vector<8x64xf32>, vector<64x256xf32>, vector<8x256xf32> -> vector<8x256xf32>
    %30 = vector.extract_strided_slice %6 {offsets = [8, 0], sizes = [8, 256], strides = [1, 1]} : vector<64x256xf32> to vector<8x256xf32>
    %31 = arith.addf %29, %30 : vector<8x256xf32>
    %32 = vector.extract_strided_slice %31 {offsets = [0, 0], sizes = [8, 192], strides = [1, 1]} : vector<8x256xf32> to vector<8x192xf32>
    %33 = arith.negf %32 : vector<8x192xf32>
    %34 = math.exp %33 : vector<8x192xf32>
    %cst_13 = arith.constant 1.000000e+00 : f32
    %35 = vector.broadcast %cst_13 : f32 to vector<8x192xf32>
    %36 = arith.addf %35, %34 : vector<8x192xf32>
    %37 = arith.divf %35, %36 : vector<8x192xf32>
    %38 = vector.extract_strided_slice %37 {offsets = [0, 0], sizes = [8, 64], strides = [1, 1]} : vector<8x192xf32> to vector<8x64xf32>
    %39 = vector.extract_strided_slice %37 {offsets = [0, 64], sizes = [8, 64], strides = [1, 1]} : vector<8x192xf32> to vector<8x64xf32>
    %40 = vector.extract_strided_slice %37 {offsets = [0, 128], sizes = [8, 64], strides = [1, 1]} : vector<8x192xf32> to vector<8x64xf32>
    %41 = vector.extract_strided_slice %31 {offsets = [0, 192], sizes = [8, 64], strides = [1, 1]} : vector<8x256xf32> to vector<8x64xf32>
    %42 = math.tanh %41 : vector<8x64xf32>
    %43 = arith.mulf %39, %26 : vector<8x64xf32>
    %44 = arith.mulf %38, %42 : vector<8x64xf32>
    %45 = arith.addf %43, %44 : vector<8x64xf32>
    %46 = math.tanh %45 : vector<8x64xf32>
    %47 = arith.mulf %40, %46 : vector<8x64xf32>
    %cst_14 = arith.constant dense<0.000000e+00> : vector<8x256xf32>
    %48 = tpu.matmul %47, %7, %cst_14 {dimension_numbers = #tpu.dot_dimension_numbers<[1], [0], [0], [1], [0, 0, 1, 1], [], []>} : vector<8x64xf32>, vector<64x256xf32>, vector<8x256xf32> -> vector<8x256xf32>
    %49 = vector.extract_strided_slice %6 {offsets = [16, 0], sizes = [8, 256], strides = [1, 1]} : vector<64x256xf32> to vector<8x256xf32>
    %50 = arith.addf %48, %49 : vector<8x256xf32>
    %51 = vector.extract_strided_slice %50 {offsets = [0, 0], sizes = [8, 192], strides = [1, 1]} : vector<8x256xf32> to vector<8x192xf32>
    %52 = arith.negf %51 : vector<8x192xf32>
    %53 = math.exp %52 : vector<8x192xf32>
    %cst_15 = arith.constant 1.000000e+00 : f32
    %54 = vector.broadcast %cst_15 : f32 to vector<8x192xf32>
    %55 = arith.addf %54, %53 : vector<8x192xf32>
    %56 = arith.divf %54, %55 : vector<8x192xf32>
    %57 = vector.extract_strided_slice %56 {offsets = [0, 0], sizes = [8, 64], strides = [1, 1]} : vector<8x192xf32> to vector<8x64xf32>
    %58 = vector.extract_strided_slice %56 {offsets = [0, 64], sizes = [8, 64], strides = [1, 1]} : vector<8x192xf32> to vector<8x64xf32>
    %59 = vector.extract_strided_slice %56 {offsets = [0, 128], sizes = [8, 64], strides = [1, 1]} : vector<8x192xf32> to vector<8x64xf32>
    %60 = vector.extract_strided_slice %50 {offsets = [0, 192], sizes = [8, 64], strides = [1, 1]} : vector<8x256xf32> to vector<8x64xf32>
    %61 = math.tanh %60 : vector<8x64xf32>
    %62 = arith.mulf %58, %45 : vector<8x64xf32>
    %63 = arith.mulf %57, %61 : vector<8x64xf32>
    %64 = arith.addf %62, %63 : vector<8x64xf32>
    %65 = math.tanh %64 : vector<8x64xf32>
    %66 = arith.mulf %59, %65 : vector<8x64xf32>
    %cst_16 = arith.constant dense<0.000000e+00> : vector<8x256xf32>
    %67 = tpu.matmul %66, %7, %cst_16 {dimension_numbers = #tpu.dot_dimension_numbers<[1], [0], [0], [1], [0, 0, 1, 1], [], []>} : vector<8x64xf32>, vector<64x256xf32>, vector<8x256xf32> -> vector<8x256xf32>
    %68 = vector.extract_strided_slice %6 {offsets = [24, 0], sizes = [8, 256], strides = [1, 1]} : vector<64x256xf32> to vector<8x256xf32>
    %69 = arith.addf %67, %68 : vector<8x256xf32>
    %70 = vector.extract_strided_slice %69 {offsets = [0, 0], sizes = [8, 192], strides = [1, 1]} : vector<8x256xf32> to vector<8x192xf32>
    %71 = arith.negf %70 : vector<8x192xf32>
    %72 = math.exp %71 : vector<8x192xf32>
    %cst_17 = arith.constant 1.000000e+00 : f32
    %73 = vector.broadcast %cst_17 : f32 to vector<8x192xf32>
    %74 = arith.addf %73, %72 : vector<8x192xf32>
    %75 = arith.divf %73, %74 : vector<8x192xf32>
    %76 = vector.extract_strided_slice %75 {offsets = [0, 0], sizes = [8, 64], strides = [1, 1]} : vector<8x192xf32> to vector<8x64xf32>
    %77 = vector.extract_strided_slice %75 {offsets = [0, 64], sizes = [8, 64], strides = [1, 1]} : vector<8x192xf32> to vector<8x64xf32>
    %78 = vector.extract_strided_slice %75 {offsets = [0, 128], sizes = [8, 64], strides = [1, 1]} : vector<8x192xf32> to vector<8x64xf32>
    %79 = vector.extract_strided_slice %69 {offsets = [0, 192], sizes = [8, 64], strides = [1, 1]} : vector<8x256xf32> to vector<8x64xf32>
    %80 = math.tanh %79 : vector<8x64xf32>
    %81 = arith.mulf %77, %64 : vector<8x64xf32>
    %82 = arith.mulf %76, %80 : vector<8x64xf32>
    %83 = arith.addf %81, %82 : vector<8x64xf32>
    %84 = math.tanh %83 : vector<8x64xf32>
    %85 = arith.mulf %78, %84 : vector<8x64xf32>
    %cst_18 = arith.constant dense<0.000000e+00> : vector<8x256xf32>
    %86 = tpu.matmul %85, %7, %cst_18 {dimension_numbers = #tpu.dot_dimension_numbers<[1], [0], [0], [1], [0, 0, 1, 1], [], []>} : vector<8x64xf32>, vector<64x256xf32>, vector<8x256xf32> -> vector<8x256xf32>
    %87 = vector.extract_strided_slice %6 {offsets = [32, 0], sizes = [8, 256], strides = [1, 1]} : vector<64x256xf32> to vector<8x256xf32>
    %88 = arith.addf %86, %87 : vector<8x256xf32>
    %89 = vector.extract_strided_slice %88 {offsets = [0, 0], sizes = [8, 192], strides = [1, 1]} : vector<8x256xf32> to vector<8x192xf32>
    %90 = arith.negf %89 : vector<8x192xf32>
    %91 = math.exp %90 : vector<8x192xf32>
    %cst_19 = arith.constant 1.000000e+00 : f32
    %92 = vector.broadcast %cst_19 : f32 to vector<8x192xf32>
    %93 = arith.addf %92, %91 : vector<8x192xf32>
    %94 = arith.divf %92, %93 : vector<8x192xf32>
    %95 = vector.extract_strided_slice %94 {offsets = [0, 0], sizes = [8, 64], strides = [1, 1]} : vector<8x192xf32> to vector<8x64xf32>
    %96 = vector.extract_strided_slice %94 {offsets = [0, 64], sizes = [8, 64], strides = [1, 1]} : vector<8x192xf32> to vector<8x64xf32>
    %97 = vector.extract_strided_slice %94 {offsets = [0, 128], sizes = [8, 64], strides = [1, 1]} : vector<8x192xf32> to vector<8x64xf32>
    %98 = vector.extract_strided_slice %88 {offsets = [0, 192], sizes = [8, 64], strides = [1, 1]} : vector<8x256xf32> to vector<8x64xf32>
    %99 = math.tanh %98 : vector<8x64xf32>
    %100 = arith.mulf %96, %83 : vector<8x64xf32>
    %101 = arith.mulf %95, %99 : vector<8x64xf32>
    %102 = arith.addf %100, %101 : vector<8x64xf32>
    %103 = math.tanh %102 : vector<8x64xf32>
    %104 = arith.mulf %97, %103 : vector<8x64xf32>
    %cst_20 = arith.constant dense<0.000000e+00> : vector<8x256xf32>
    %105 = tpu.matmul %104, %7, %cst_20 {dimension_numbers = #tpu.dot_dimension_numbers<[1], [0], [0], [1], [0, 0, 1, 1], [], []>} : vector<8x64xf32>, vector<64x256xf32>, vector<8x256xf32> -> vector<8x256xf32>
    %106 = vector.extract_strided_slice %6 {offsets = [40, 0], sizes = [8, 256], strides = [1, 1]} : vector<64x256xf32> to vector<8x256xf32>
    %107 = arith.addf %105, %106 : vector<8x256xf32>
    %108 = vector.extract_strided_slice %107 {offsets = [0, 0], sizes = [8, 192], strides = [1, 1]} : vector<8x256xf32> to vector<8x192xf32>
    %109 = arith.negf %108 : vector<8x192xf32>
    %110 = math.exp %109 : vector<8x192xf32>
    %cst_21 = arith.constant 1.000000e+00 : f32
    %111 = vector.broadcast %cst_21 : f32 to vector<8x192xf32>
    %112 = arith.addf %111, %110 : vector<8x192xf32>
    %113 = arith.divf %111, %112 : vector<8x192xf32>
    %114 = vector.extract_strided_slice %113 {offsets = [0, 0], sizes = [8, 64], strides = [1, 1]} : vector<8x192xf32> to vector<8x64xf32>
    %115 = vector.extract_strided_slice %113 {offsets = [0, 64], sizes = [8, 64], strides = [1, 1]} : vector<8x192xf32> to vector<8x64xf32>
    %116 = vector.extract_strided_slice %113 {offsets = [0, 128], sizes = [8, 64], strides = [1, 1]} : vector<8x192xf32> to vector<8x64xf32>
    %117 = vector.extract_strided_slice %107 {offsets = [0, 192], sizes = [8, 64], strides = [1, 1]} : vector<8x256xf32> to vector<8x64xf32>
    %118 = math.tanh %117 : vector<8x64xf32>
    %119 = arith.mulf %115, %102 : vector<8x64xf32>
    %120 = arith.mulf %114, %118 : vector<8x64xf32>
    %121 = arith.addf %119, %120 : vector<8x64xf32>
    %122 = math.tanh %121 : vector<8x64xf32>
    %123 = arith.mulf %116, %122 : vector<8x64xf32>
    %cst_22 = arith.constant dense<0.000000e+00> : vector<8x256xf32>
    %124 = tpu.matmul %123, %7, %cst_22 {dimension_numbers = #tpu.dot_dimension_numbers<[1], [0], [0], [1], [0, 0, 1, 1], [], []>} : vector<8x64xf32>, vector<64x256xf32>, vector<8x256xf32> -> vector<8x256xf32>
    %125 = vector.extract_strided_slice %6 {offsets = [48, 0], sizes = [8, 256], strides = [1, 1]} : vector<64x256xf32> to vector<8x256xf32>
    %126 = arith.addf %124, %125 : vector<8x256xf32>
    %127 = vector.extract_strided_slice %126 {offsets = [0, 0], sizes = [8, 192], strides = [1, 1]} : vector<8x256xf32> to vector<8x192xf32>
    %128 = arith.negf %127 : vector<8x192xf32>
    %129 = math.exp %128 : vector<8x192xf32>
    %cst_23 = arith.constant 1.000000e+00 : f32
    %130 = vector.broadcast %cst_23 : f32 to vector<8x192xf32>
    %131 = arith.addf %130, %129 : vector<8x192xf32>
    %132 = arith.divf %130, %131 : vector<8x192xf32>
    %133 = vector.extract_strided_slice %132 {offsets = [0, 0], sizes = [8, 64], strides = [1, 1]} : vector<8x192xf32> to vector<8x64xf32>
    %134 = vector.extract_strided_slice %132 {offsets = [0, 64], sizes = [8, 64], strides = [1, 1]} : vector<8x192xf32> to vector<8x64xf32>
    %135 = vector.extract_strided_slice %132 {offsets = [0, 128], sizes = [8, 64], strides = [1, 1]} : vector<8x192xf32> to vector<8x64xf32>
    %136 = vector.extract_strided_slice %126 {offsets = [0, 192], sizes = [8, 64], strides = [1, 1]} : vector<8x256xf32> to vector<8x64xf32>
    %137 = math.tanh %136 : vector<8x64xf32>
    %138 = arith.mulf %134, %121 : vector<8x64xf32>
    %139 = arith.mulf %133, %137 : vector<8x64xf32>
    %140 = arith.addf %138, %139 : vector<8x64xf32>
    %141 = math.tanh %140 : vector<8x64xf32>
    %142 = arith.mulf %135, %141 : vector<8x64xf32>
    %cst_24 = arith.constant dense<0.000000e+00> : vector<8x256xf32>
    %143 = tpu.matmul %142, %7, %cst_24 {dimension_numbers = #tpu.dot_dimension_numbers<[1], [0], [0], [1], [0, 0, 1, 1], [], []>} : vector<8x64xf32>, vector<64x256xf32>, vector<8x256xf32> -> vector<8x256xf32>
    %144 = vector.extract_strided_slice %6 {offsets = [56, 0], sizes = [8, 256], strides = [1, 1]} : vector<64x256xf32> to vector<8x256xf32>
    %145 = arith.addf %143, %144 : vector<8x256xf32>
    %146 = vector.extract_strided_slice %145 {offsets = [0, 0], sizes = [8, 192], strides = [1, 1]} : vector<8x256xf32> to vector<8x192xf32>
    %147 = arith.negf %146 : vector<8x192xf32>
    %148 = math.exp %147 : vector<8x192xf32>
    %cst_25 = arith.constant 1.000000e+00 : f32
    %149 = vector.broadcast %cst_25 : f32 to vector<8x192xf32>
    %150 = arith.addf %149, %148 : vector<8x192xf32>
    %151 = arith.divf %149, %150 : vector<8x192xf32>
    %152 = vector.extract_strided_slice %151 {offsets = [0, 0], sizes = [8, 64], strides = [1, 1]} : vector<8x192xf32> to vector<8x64xf32>
    %153 = vector.extract_strided_slice %151 {offsets = [0, 64], sizes = [8, 64], strides = [1, 1]} : vector<8x192xf32> to vector<8x64xf32>
    %154 = vector.extract_strided_slice %151 {offsets = [0, 128], sizes = [8, 64], strides = [1, 1]} : vector<8x192xf32> to vector<8x64xf32>
    %155 = vector.extract_strided_slice %145 {offsets = [0, 192], sizes = [8, 64], strides = [1, 1]} : vector<8x256xf32> to vector<8x64xf32>
    %156 = math.tanh %155 : vector<8x64xf32>
    %157 = arith.mulf %153, %140 : vector<8x64xf32>
    %158 = arith.mulf %152, %156 : vector<8x64xf32>
    %159 = arith.addf %157, %158 : vector<8x64xf32>
    %160 = math.tanh %159 : vector<8x64xf32>
    %161 = arith.mulf %154, %160 : vector<8x64xf32>
    %162 = vector.extract_strided_slice %28 {offsets = [0, 0], sizes = [8, 32], strides = [1, 1]} : vector<8x64xf32> to vector<8x32xf32>
    %163 = vector.extract_strided_slice %47 {offsets = [0, 0], sizes = [8, 32], strides = [1, 1]} : vector<8x64xf32> to vector<8x32xf32>
    %164 = vector.extract_strided_slice %66 {offsets = [0, 0], sizes = [8, 32], strides = [1, 1]} : vector<8x64xf32> to vector<8x32xf32>
    %165 = vector.extract_strided_slice %85 {offsets = [0, 0], sizes = [8, 32], strides = [1, 1]} : vector<8x64xf32> to vector<8x32xf32>
    %166 = vector.extract_strided_slice %104 {offsets = [0, 0], sizes = [8, 32], strides = [1, 1]} : vector<8x64xf32> to vector<8x32xf32>
    %167 = vector.extract_strided_slice %123 {offsets = [0, 0], sizes = [8, 32], strides = [1, 1]} : vector<8x64xf32> to vector<8x32xf32>
    %168 = vector.extract_strided_slice %142 {offsets = [0, 0], sizes = [8, 32], strides = [1, 1]} : vector<8x64xf32> to vector<8x32xf32>
    %169 = vector.extract_strided_slice %161 {offsets = [0, 0], sizes = [8, 32], strides = [1, 1]} : vector<8x64xf32> to vector<8x32xf32>
    %170 = tpu.concatenate %162, %163, %164, %165, %166, %167, %168, %169 in 0 : vector<8x32xf32>, vector<8x32xf32>, vector<8x32xf32>, vector<8x32xf32>, vector<8x32xf32>, vector<8x32xf32>, vector<8x32xf32>, vector<8x32xf32> -> vector<64x32xf32>
    %171 = vector.extract_strided_slice %161 {offsets = [0, 32], sizes = [8, 32], strides = [1, 1]} : vector<8x64xf32> to vector<8x32xf32>
    %172 = vector.extract_strided_slice %142 {offsets = [0, 32], sizes = [8, 32], strides = [1, 1]} : vector<8x64xf32> to vector<8x32xf32>
    %173 = vector.extract_strided_slice %123 {offsets = [0, 32], sizes = [8, 32], strides = [1, 1]} : vector<8x64xf32> to vector<8x32xf32>
    %174 = vector.extract_strided_slice %104 {offsets = [0, 32], sizes = [8, 32], strides = [1, 1]} : vector<8x64xf32> to vector<8x32xf32>
    %175 = vector.extract_strided_slice %85 {offsets = [0, 32], sizes = [8, 32], strides = [1, 1]} : vector<8x64xf32> to vector<8x32xf32>
    %176 = vector.extract_strided_slice %66 {offsets = [0, 32], sizes = [8, 32], strides = [1, 1]} : vector<8x64xf32> to vector<8x32xf32>
    %177 = vector.extract_strided_slice %47 {offsets = [0, 32], sizes = [8, 32], strides = [1, 1]} : vector<8x64xf32> to vector<8x32xf32>
    %178 = vector.extract_strided_slice %28 {offsets = [0, 32], sizes = [8, 32], strides = [1, 1]} : vector<8x64xf32> to vector<8x32xf32>
    %179 = tpu.concatenate %171, %172, %173, %174, %175, %176, %177, %178 in 0 : vector<8x32xf32>, vector<8x32xf32>, vector<8x32xf32>, vector<8x32xf32>, vector<8x32xf32>, vector<8x32xf32>, vector<8x32xf32>, vector<8x32xf32> -> vector<64x32xf32>
    %180 = tpu.concatenate %170, %179 in 1 : vector<64x32xf32>, vector<64x32xf32> -> vector<64x64xf32>
    %c0_26 = arith.constant 0 : index
    %c0_27 = arith.constant 0 : index
    %181 = vector.load %arg5[%c0_26, %c0_27] : memref<64x128xf32, #tpu.memory_space<vmem>>, vector<64x128xf32>
    %cst_28 = arith.constant dense<0.000000e+00> : vector<64x128xf32>
    %182 = tpu.matmul %180, %181, %cst_28 {dimension_numbers = #tpu.dot_dimension_numbers<[1], [0], [0], [1], [0, 0, 1, 1], [], []>} : vector<64x64xf32>, vector<64x128xf32>, vector<64x128xf32> -> vector<64x128xf32>
    %c0_29 = arith.constant 0 : index
    %c0_30 = arith.constant 0 : index
    %183 = vector.load %arg6[%c0_29, %c0_30] : memref<1x128xf32, #tpu.memory_space<vmem>>, vector<1x128xf32>
    %184 = vector.broadcast %183 : vector<1x128xf32> to vector<64x128xf32>
    %185 = arith.addf %182, %184 : vector<64x128xf32>
    %cst_31 = arith.constant dense<0xFF800000> : vector<64xf32>
    %186 = vector.multi_reduction <maximumf>, %185, %cst_31 [1] : vector<64x128xf32> to vector<64xf32>
    %187 = vector.shape_cast %186 : vector<64xf32> to vector<64x1xf32>
    %188 = vector.broadcast %187 : vector<64x1xf32> to vector<64x128xf32>
    %189 = arith.subf %185, %188 : vector<64x128xf32>
    %190 = math.exp %189 : vector<64x128xf32>
    %cst_32 = arith.constant dense<0.000000e+00> : vector<64xf32>
    %191 = vector.multi_reduction <add>, %190, %cst_32 [1] : vector<64x128xf32> to vector<64xf32>
    %192 = vector.shape_cast %191 : vector<64xf32> to vector<64x1xf32>
    %193 = math.log %192 : vector<64x1xf32>
    %194 = arith.addf %193, %187 : vector<64x1xf32>
    %195 = vector.broadcast %194 : vector<64x1xf32> to vector<64x128xf32>
    %196 = arith.subf %185, %195 : vector<64x128xf32>
    %197 = vector.shape_cast %196 : vector<64x128xf32> to vector<8x8x128xf32>
    %c0_33 = arith.constant 0 : index
    %c0_34 = arith.constant 0 : index
    %c0_35 = arith.constant 0 : index
    %198 = vector.load %arg7[%c0_33, %c0_34, %c0_35] : memref<8x8x128xf32, #tpu.memory_space<vmem>>, vector<8x8x128xf32>
    tpu.vector_store %arg7[%c0_33, %c0_34, %c0_35], %197 {strides = array<i32>} : memref<8x8x128xf32, #tpu.memory_space<vmem>>, vector<8x8x128xf32>,
    return
  }
  func.func @transform_0(%arg0: i32) -> (i32, i32, i32) {
    %c0_i32 = arith.constant 0 : i32
    %c0_i32_0 = arith.constant 0 : i32
    %c0_i32_1 = arith.constant 0 : i32
    return %c0_i32, %arg0, %c0_i32_0 : i32, i32, i32
  }
  func.func @transform_1(%arg0: i32) -> (i32, i32) {
    %c0_i32 = arith.constant 0 : i32
    %c0_i32_0 = arith.constant 0 : i32
    %c0_i32_1 = arith.constant 0 : i32
    return %c0_i32, %c0_i32_0 : i32, i32
  }
  func.func @transform_2(%arg0: i32) -> (i32, i32) {
    %c0_i32 = arith.constant 0 : i32
    %c0_i32_0 = arith.constant 0 : i32
    %c0_i32_1 = arith.constant 0 : i32
    return %c0_i32, %c0_i32_0 : i32, i32
  }
  func.func @transform_3(%arg0: i32) -> (i32, i32) {
    %c0_i32 = arith.constant 0 : i32
    %c0_i32_0 = arith.constant 0 : i32
    %c0_i32_1 = arith.constant 0 : i32
    return %c0_i32, %c0_i32_0 : i32, i32
  }
  func.func @transform_4(%arg0: i32) -> (i32, i32) {
    %c0_i32 = arith.constant 0 : i32
    %c0_i32_0 = arith.constant 0 : i32
    %c0_i32_1 = arith.constant 0 : i32
    return %c0_i32, %c0_i32_0 : i32, i32
  }
  func.func @transform_5(%arg0: i32) -> (i32, i32) {
    %c0_i32 = arith.constant 0 : i32
    %c0_i32_0 = arith.constant 0 : i32
    %c0_i32_1 = arith.constant 0 : i32
    return %c0_i32, %c0_i32_0 : i32, i32
  }
  func.func @transform_6(%arg0: i32) -> (i32, i32, i32) {
    %c0_i32 = arith.constant 0 : i32
    %c0_i32_0 = arith.constant 0 : i32
    %c0_i32_1 = arith.constant 0 : i32
    return %c0_i32, %arg0, %c0_i32_0 : i32, i32, i32
  }
}

</mosaic_0001>

<llo_original>
// kernel: tpu_custom_call.1
$region0: #{tpu_custom_call.1}
  #allocation0 [shape = 'u32[]', space=smem, size = 0x4, offset = 0x4, fixed_abs, tag = 'smem constant byte address 0x4 - core index']
  #allocation1 [shape = 'u32[144,128]{1,0:T(1,128)}', space=vmem, size = 0x12000, scoped, tag = 'internal scratch']
  %s0 = inlined_call_operand.hbm [shape: f32[8,16,96], index: 0, kind: input, shape index: {}]
  %s1 = inlined_call_operand.hbm [shape: f32[96,256], index: 1, kind: input, shape index: {}]
  %s2 = inlined_call_operand.vmem [shape: f32[1,256], index: 2, kind: input, shape index: {}]
  %s3 = inlined_call_operand.hbm [shape: f32[64,256], index: 3, kind: input, shape index: {}]
  %s4 = inlined_call_operand.hbm [shape: f32[64,128], index: 4, kind: input, shape index: {}]
  %s5 = inlined_call_operand.vmem [shape: f32[1,128], index: 5, kind: input, shape index: {}]
  %s6 = inlined_call_operand.hbm [shape: f32[8,16,128], index: 6, kind: output, shape index: {}]
  %s7 = sld [smem:[#allocation0]]
  $region73: #{tpu_custom_call.1} parent=0
    _
  %s9 = ssub.s32 1, %s7
  %s10 = scalar_select 0, %s9, %s7
  $region1: #{tpu_custom_call.1} parent=0
    #allocation2 [shape = 'u8[65536]{0}', space=vmem, size = 0x10000, scoped, tag = 'input window, operand 0']
    #allocation3 [shape = 's32[2]{0}', space=sflag, size = 0x8, scoped, tag = 'scoped memory for tpu_custom_call.1']
    #allocation4 [shape = 's32[2]{0}', space=sflag, size = 0x8, scoped, tag = 'scoped memory for tpu_custom_call.1']
    #allocation5 [shape = 'u8[98304]{0}', space=vmem, size = 0x18000, scoped, tag = 'input window, operand 1, single buffered']
    #allocation6 [shape = 's32[1]{0}', space=sflag, size = 0x4, scoped, tag = 'scoped memory for tpu_custom_call.1']
    #allocation7 [shape = 'u8[65536]{0}', space=vmem, size = 0x10000, scoped, tag = 'input window, operand 3, single buffered']
    #allocation8 [shape = 'u8[32768]{0}', space=vmem, size = 0x8000, scoped, tag = 'input window, operand 4, single buffered']
    #allocation9 [shape = 's32[1]{0}', space=sflag, size = 0x4, scoped, tag = 'scoped memory for tpu_custom_call.1']
    #allocation10 [shape = 'u8[65536]{0}', space=vmem, size = 0x10000, scoped, tag = 'output window, operand 0']
    %11 = vsyncpa [#allocation3], 0
    %s12 = scalar_lea.sflag [#allocation3], 1
    %13 = vsyncpa %s12, 0
    %14 = vsyncpa [#allocation6], 0
    %15 = vsyncpa [#allocation9], 0
    %16 = vsyncpa [#allocation4], 0
    %s17 = scalar_lea.sflag [#allocation4], 1
    %18 = vsyncpa %s17, 0
    loop: start=0, step=1, limit=4
    $region2: #{tpu_custom_call.1} parent=1 // loop_pre_header
      _
    $region3: #{tpu_custom_call.1} parent=1 // loop_header
      %s20 = sphi 0, %s24
      %p21 = scmp.ge.s32.totalorder %s20, 4
      %s30 = sphi 0, %s32
      %s33 = sphi 0, %s30
      %s34 = sphi 0, %s33
      %s50 = sphi 0, %s34
      %s54 = sphi 0, %s54
      %s56 = sphi 0, %s54
      %s57 = sphi 0, %s56
      %s71 = sphi 0, %s57
      %s75 = sphi 0, %s75
      %s77 = sphi 0, %s75
      %s78 = sphi 0, %s77
      %s92 = sphi 0, %s78
      %s96 = sphi 0, %s96
      %s98 = sphi 0, %s96
      %s99 = sphi 0, %s98
      %s113 = sphi 0, %s99
      %s117 = sphi 0, %s117
      %s119 = sphi 0, %s117
      %s120 = sphi 0, %s119
      %s134 = sphi 0, %s120
      %s138 = sphi 0, %s138
      %s140 = sphi 0, %s138
      %s141 = sphi 0, %s140
      %s155 = sphi 0, %s141
      %s161 = sphi 0, %s163
      %s164 = sphi 0, %s161
      %s165 = sphi 0, %s164
      %s181 = sphi 0, %s165
    $region4: #{tpu_custom_call.1} parent=1 // loop_header_branch
      %23 = sbr.rel (%p21) target = $region8
    $region5: #{tpu_custom_call.1} parent=1 // loop_body
      %s25 = ssub.s32 %s20, 1
      %s26 = ssub.s32 %s20, 2
      %s27 = sadd.s32 %s20, 1
      %s28 = ssub.s32 %s20, %s27
      %p29 = scmp.eq.s32.totalorder %s28, 0
      %s31 = sadd.s32 %s30, 1
      %s32 = scalar_select %p29, %s30, %s31
      %p35 = pneg %p29
      %p36 = scmp.eq.s32.totalorder %s20, 1
      %p37 = por %p35, %p36
      %p38 = scmp.ne.s32.totalorder %s30, %s33
      %p39 = scmp.eq.s32.totalorder %s20, 0
      %p40 = por %p38, %p39
      %p41 = scmp.ne.s32.totalorder %s30, %s33
      %p42 = scmp.eq.s32.totalorder %s25, 1
      %p43 = por %p41, %p42
      %p44 = scmp.ne.s32.totalorder %s33, %s34
      %p45 = scmp.eq.s32.totalorder %s25, 0
      %p46 = por %p44, %p45
      %p47 = scmp.ne.s32.totalorder %s33, %s34
      %p48 = scmp.eq.s32.totalorder %s26, 1
      %p49 = por %p47, %p48
      %p51 = scmp.ne.s32.totalorder %s34, %s50
      %p52 = scmp.eq.s32.totalorder %s26, 0
      %p53 = por %p51, %p52
      %s55 = sadd.s32 %s54, 1
      %p58 = scmp.eq.s32.totalorder %s20, 1
      %p59 = scmp.ne.s32.totalorder %s54, %s56
      %p60 = scmp.eq.s32.totalorder %s20, 0
      %p61 = por %p59, %p60
      %p62 = scmp.ne.s32.totalorder %s54, %s56
      %p63 = scmp.eq.s32.totalorder %s25, 1
      %p64 = por %p62, %p63
      %p65 = scmp.ne.s32.totalorder %s56, %s57
      %p66 = scmp.eq.s32.totalorder %s25, 0
      %p67 = por %p65, %p66
      %p68 = scmp.ne.s32.totalorder %s56, %s57
      %p69 = scmp.eq.s32.totalorder %s26, 1
      %p70 = por %p68, %p69
      %p72 = scmp.ne.s32.totalorder %s57, %s71
      %p73 = scmp.eq.s32.totalorder %s26, 0
      %p74 = por %p72, %p73
      %s76 = sadd.s32 %s75, 1
      %p79 = scmp.eq.s32.totalorder %s20, 1
      %p80 = scmp.ne.s32.totalorder %s75, %s77
      %p81 = scmp.eq.s32.totalorder %s20, 0
      %p82 = por %p80, %p81
      %p83 = scmp.ne.s32.totalorder %s75, %s77
      %p84 = scmp.eq.s32.totalorder %s25, 1
      %p85 = por %p83, %p84
      %p86 = scmp.ne.s32.totalorder %s77, %s78
      %p87 = scmp.eq.s32.totalorder %s25, 0
      %p88 = por %p86, %p87
      %p89 = scmp.ne.s32.totalorder %s77, %s78
      %p90 = scmp.eq.s32.totalorder %s26, 1
      %p91 = por %p89, %p90
      %p93 = scmp.ne.s32.totalorder %s78, %s92
      %p94 = scmp.eq.s32.totalorder %s26, 0
      %p95 = por %p93, %p94
      %s97 = sadd.s32 %s96, 1
      %p100 = scmp.eq.s32.totalorder %s20, 1
      %p101 = scmp.ne.s32.totalorder %s96, %s98
      %p102 = scmp.eq.s32.totalorder %s20, 0
      %p103 = por %p101, %p102
      %p104 = scmp.ne.s32.totalorder %s96, %s98
      %p105 = scmp.eq.s32.totalorder %s25, 1
      %p106 = por %p104, %p105
      %p107 = scmp.ne.s32.totalorder %s98, %s99
      %p108 = scmp.eq.s32.totalorder %s25, 0
      %p109 = por %p107, %p108
      %p110 = scmp.ne.s32.totalorder %s98, %s99
      %p111 = scmp.eq.s32.totalorder %s26, 1
      %p112 = por %p110, %p111
      %p114 = scmp.ne.s32.totalorder %s99, %s113
      %p115 = scmp.eq.s32.totalorder %s26, 0
      %p116 = por %p114, %p115
      %s118 = sadd.s32 %s117, 1
      %p121 = scmp.eq.s32.totalorder %s20, 1
      %p122 = scmp.ne.s32.totalorder %s117, %s119
      %p123 = scmp.eq.s32.totalorder %s20, 0
      %p124 = por %p122, %p123
      %p125 = scmp.ne.s32.totalorder %s117, %s119
      %p126 = scmp.eq.s32.totalorder %s25, 1
      %p127 = por %p125, %p126
      %p128 = scmp.ne.s32.totalorder %s119, %s120
      %p129 = scmp.eq.s32.totalorder %s25, 0
      %p130 = por %p128, %p129
      %p131 = scmp.ne.s32.totalorder %s119, %s120
      %p132 = scmp.eq.s32.totalorder %s26, 1
      %p133 = por %p131, %p132
      %p135 = scmp.ne.s32.totalorder %s120, %s134
      %p136 = scmp.eq.s32.totalorder %s26, 0
      %p137 = por %p135, %p136
      %s139 = sadd.s32 %s138, 1
      %p142 = scmp.eq.s32.totalorder %s20, 1
      %p143 = scmp.ne.s32.totalorder %s138, %s140
      %p144 = scmp.eq.s32.totalorder %s20, 0
      %p145 = por %p143, %p144
      %p146 = scmp.ne.s32.totalorder %s138, %s140
      %p147 = scmp.eq.s32.totalorder %s25, 1
      %p148 = por %p146, %p147
      %p149 = scmp.ne.s32.totalorder %s140, %s141
      %p150 = scmp.eq.s32.totalorder %s25, 0
      %p151 = por %p149, %p150
      %p152 = scmp.ne.s32.totalorder %s140, %s141
      %p153 = scmp.eq.s32.totalorder %s26, 1
      %p154 = por %p152, %p153
      %p156 = scmp.ne.s32.totalorder %s141, %s155
      %p157 = scmp.eq.s32.totalorder %s26, 0
      %p158 = por %p156, %p157
      %s159 = ssub.s32 %s20, %s27
      %p160 = scmp.eq.s32.totalorder %s159, 0
      %s162 = sadd.s32 %s161, 1
      %s163 = scalar_select %p160, %s161, %s162
      %p166 = pneg %p160
      %p167 = scmp.eq.s32.totalorder %s20, 1
      %p168 = por %p166, %p167
      %p169 = scmp.ne.s32.totalorder %s161, %s164
      %p170 = scmp.eq.s32.totalorder %s20, 0
      %p171 = por %p169, %p170
      %p172 = scmp.ne.s32.totalorder %s161, %s164
      %p173 = scmp.eq.s32.totalorder %s25, 1
      %p174 = por %p172, %p173
      %p175 = scmp.ne.s32.totalorder %s164, %s165
      %p176 = scmp.eq.s32.totalorder %s25, 0
      %p177 = por %p175, %p176
      %p178 = scmp.ne.s32.totalorder %s164, %s165
      %p179 = scmp.eq.s32.totalorder %s26, 1
      %p180 = por %p178, %p179
      %p182 = scmp.ne.s32.totalorder %s165, %s181
      %p183 = scmp.eq.s32.totalorder %s26, 0
      %p184 = por %p182, %p183
      %p185 = scmp.le.s32.totalorder 1, %s20
      %p186 = scmp.lt.s32.totalorder %s20, 3
      %p187 = pnand %p185, %p186
      %p188 = pneg %p187
      // Predicated region
      $region9: #{tpu_custom_call.1} parent=5 // pred_check
        _
      $region10: #{tpu_custom_call.1} parent=5 // pred_check_branch
        %190 = sbr.rel (%p187) target = $region12
      $region11: #{tpu_custom_call.1} parent=5 // pred_region
        %s191 = ssub.s32 %s20, 1
        // Predicated region
        $region13: #{tpu_custom_call.1} parent=11 // pred_check
          %p192 = pneg %p67
        $region14: #{tpu_custom_call.1} parent=11 // pred_check_branch
          %194 = sbr.rel (%p192) target = $region16
        $region15: #{tpu_custom_call.1} parent=11 // pred_region
          %s196 = ssub.s32 3072, 3072
          %197 = vsyncadd [#allocation6], %s196
          %s198 = sshll.u32 [#allocation5], 4
          %s199 = int_to_ptr.vmem [resolvable:$true] %s198
          %204 = dma.hbm_to_vmem [thread:$0]  %s1, 3072, %s199, [#allocation6], 256, 256, 16
        $region16: #{tpu_custom_call.1} parent=11 // pred_fallthru
          _
        // Predicated region
        $region17: #{tpu_custom_call.1} parent=11 // pred_check
          %p205 = pneg %p88
        $region18: #{tpu_custom_call.1} parent=11 // pred_check_branch
          %207 = sbr.rel (%p205) target = $region20
        $region19: #{tpu_custom_call.1} parent=11 // pred_region
          _
        $region20: #{tpu_custom_call.1} parent=11 // pred_fallthru
          _
        // Predicated region
        $region21: #{tpu_custom_call.1} parent=11 // pred_check
          %p208 = pneg %p109
        $region22: #{tpu_custom_call.1} parent=11 // pred_check_branch
          %210 = sbr.rel (%p208) target = $region24
        $region23: #{tpu_custom_call.1} parent=11 // pred_region
          %s212 = ssub.s32 2048, 2048
          %213 = vsyncadd [#allocation6], %s212
          %s214 = sshll.u32 [#allocation7], 4
          %s215 = int_to_ptr.vmem [resolvable:$true] %s214
          %220 = dma.hbm_to_vmem [thread:$0]  %s3, 2048, %s215, [#allocation6], 256, 256, 16
        $region24: #{tpu_custom_call.1} parent=11 // pred_fallthru
          _
        // Predicated region
        $region25: #{tpu_custom_call.1} parent=11 // pred_check
          %p221 = pneg %p130
        $region26: #{tpu_custom_call.1} parent=11 // pred_check_branch
          %223 = sbr.rel (%p221) target = $region28
        $region27: #{tpu_custom_call.1} parent=11 // pred_region
          %s225 = ssub.s32 1024, 1024
          %226 = vsyncadd [#allocation9], %s225
          %s227 = sshll.u32 [#allocation8], 4
          %s228 = int_to_ptr.vmem [resolvable:$true] %s227
          %233 = dma.hbm_to_vmem [thread:$0]  %s4, 1024, %s228, [#allocation9], 128, 128, 8
        $region28: #{tpu_custom_call.1} parent=11 // pred_fallthru
          _
        // Predicated region
        $region29: #{tpu_custom_call.1} parent=11 // pred_check
          %p234 = pneg %p151
        $region30: #{tpu_custom_call.1} parent=11 // pred_check_branch
          %236 = sbr.rel (%p234) target = $region32
        $region31: #{tpu_custom_call.1} parent=11 // pred_region
          _
        $region32: #{tpu_custom_call.1} parent=11 // pred_fallthru
          _
      $region12: #{tpu_custom_call.1} parent=5 // pred_fallthru
        _
      %p237 = scmp.lt.s32.totalorder %s20, 2
      // Predicated region
      $region33: #{tpu_custom_call.1} parent=5 // pred_check
        %p238 = pneg %p237
      $region34: #{tpu_custom_call.1} parent=5 // pred_check_branch
        %240 = sbr.rel (%p238) target = $region36
      $region35: #{tpu_custom_call.1} parent=5 // pred_region
        // Predicated region
        $region37: #{tpu_custom_call.1} parent=35 // pred_check
          %p241 = pneg %p40
        $region38: #{tpu_custom_call.1} parent=35 // pred_check_branch
          %243 = sbr.rel (%p241) target = $region40
        $region39: #{tpu_custom_call.1} parent=35 // pred_region
          %s244 = sand.u32 %s30, 1
          %s245 = scalar_lea.sflag [#allocation3], %s244
          %s246 = sand.u32 %s30, 1
          %s247 = smul.addr %s246, 64
          %s248 = scalar_lea.vmem [#allocation2], %s247
          %s250 = ssub.s32 1024, 1024
          %251 = vsyncadd %s245, %s250
          %s252 = smul.addr %s20, 128
          %s253 = scalar_lea.hbm %s0, %s252
          %s254 = sshll.u32 %s248, 4
          %s255 = int_to_ptr.vmem [resolvable:$true] %s254
          %260 = dma.hbm_to_vmem [thread:$0]  %s253, 1024, %s255, %s245, 256, 128, 8
        $region40: #{tpu_custom_call.1} parent=35 // pred_fallthru
          _
      $region36: #{tpu_custom_call.1} parent=5 // pred_fallthru
        _
      %p261 = scmp.le.s32.totalorder 1, %s20
      %p262 = scmp.lt.s32.totalorder %s20, 3
      %p263 = pnand %p261, %p262
      %p264 = pneg %p263
      // Predicated region
      $region41: #{tpu_custom_call.1} parent=5 // pred_check
        _
      $region42: #{tpu_custom_call.1} parent=5 // pred_check_branch
        %266 = sbr.rel (%p263) target = $region44
      $region43: #{tpu_custom_call.1} parent=5 // pred_region
        %s267 = ssub.s32 %s20, 1
        %s268 = sand.u32 %s33, 1
        %s269 = scalar_lea.sflag [#allocation3], %s268
        %s270 = sand.u32 %s33, 1
        %s271 = smul.addr %s270, 64
        %s272 = scalar_lea.vmem [#allocation2], %s271
        // Predicated region
        $region45: #{tpu_custom_call.1} parent=43 // pred_check
          %p273 = pneg %p46
        $region46: #{tpu_custom_call.1} parent=43 // pred_check_branch
          %275 = sbr.rel (%p273) target = $region48
        $region47: #{tpu_custom_call.1} parent=43 // pred_region
          %276 = dma.done %s269, 1024
        $region48: #{tpu_custom_call.1} parent=43 // pred_fallthru
          _
        // Predicated region
        $region49: #{tpu_custom_call.1} parent=43 // pred_check
          %p277 = pneg %p67
        $region50: #{tpu_custom_call.1} parent=43 // pred_check_branch
          %279 = sbr.rel (%p277) target = $region52
        $region51: #{tpu_custom_call.1} parent=43 // pred_region
          %280 = dma.done [#allocation6], 3072
        $region52: #{tpu_custom_call.1} parent=43 // pred_fallthru
          _
        // Predicated region
        $region53: #{tpu_custom_call.1} parent=43 // pred_check
          %p281 = pneg %p109
        $region54: #{tpu_custom_call.1} parent=43 // pred_check_branch
          %283 = sbr.rel (%p281) target = $region56
        $region55: #{tpu_custom_call.1} parent=43 // pred_region
          %284 = dma.done [#allocation6], 2048
        $region56: #{tpu_custom_call.1} parent=43 // pred_fallthru
          _
        // Predicated region
        $region57: #{tpu_custom_call.1} parent=43 // pred_check
          %p285 = pneg %p130
        $region58: #{tpu_custom_call.1} parent=43 // pred_check_branch
          %287 = sbr.rel (%p285) target = $region60
        $region59: #{tpu_custom_call.1} parent=43 // pred_region
          %288 = dma.done [#allocation9], 1024
        $region60: #{tpu_custom_call.1} parent=43 // pred_fallthru
          _
        %s289 = sand.u32 %s33, 1
        %s290 = scalar_lea.sflag [#allocation3], %s289
        %s291 = sand.u32 %s33, 1
        %s292 = smul.addr %s291, 64
        %s293 = scalar_lea.vmem [#allocation2], %s292
        %p294 = pneg %p46
        %p295 = pneg %p43
        %p296 = pneg %p67
        %p297 = pneg %p64
        %p298 = pneg %p88
        %p299 = pneg %p85
        %p300 = pneg %p109
        %p301 = pneg %p106
        %p302 = pneg %p130
        %p303 = pneg %p127
        %p304 = pneg %p151
        %p305 = pneg %p148
        %p306 = pneg %p177
        %p307 = pneg %p174
        %s308 = sand.u32 %s164, 1
        %s309 = scalar_lea.sflag [#allocation4], %s308
        %s310 = sand.u32 %s164, 1
        %s311 = smul.addr %s310, 64
        %s312 = scalar_lea.vmem [#allocation10], %s311
        %v313 = vld [vmem:[%s272] sm:$0xff]
        %v314 = vld [vmem:[%s272 + $0x8] sm:$0xff]
        %v315 = vld [vmem:[%s272 + $0x10] sm:$0xff]
        %v316 = vld [vmem:[%s272 + $0x18] sm:$0xff]
        %v317 = vld [vmem:[%s272 + $0x20] sm:$0xff]
        %v318 = vld [vmem:[%s272 + $0x28] sm:$0xff]
        %v319 = vld [vmem:[%s272 + $0x30] sm:$0xff]
        %v320 = vld [vmem:[%s272 + $0x38] sm:$0xff]
        %v321 = vld [vmem:[#allocation5] sm:$0xff]
        %v322 = vld [vmem:[#allocation5 + $0x8] sm:$0xff]
        %v323 = vld [vmem:[#allocation5 + $0x10] sm:$0xff]
        %v324 = vld [vmem:[#allocation5 + $0x18] sm:$0xff]
        %v325 = vld [vmem:[#allocation5 + $0x20] sm:$0xff]
        %v326 = vld [vmem:[#allocation5 + $0x28] sm:$0xff]
        %v327 = vld [vmem:[#allocation5 + $0x30] sm:$0xff]
        %v328 = vld [vmem:[#allocation5 + $0x38] sm:$0xff]
        %v329 = vld [vmem:[#allocation5 + $0x40] sm:$0xff]
        %v330 = vld [vmem:[#allocation5 + $0x48] sm:$0xff]
        %v331 = vld [vmem:[#allocation5 + $0x50] sm:$0xff]
        %v332 = vld [vmem:[#allocation5 + $0x58] sm:$0xff]
        %v333 = vld [vmem:[#allocation5 + $0x60] sm:$0xff]
        %v334 = vld [vmem:[#allocation5 + $0x68] sm:$0xff]
        %v335 = vld [vmem:[#allocation5 + $0x70] sm:$0xff]
        %v336 = vld [vmem:[#allocation5 + $0x78] sm:$0xff]
        %v337 = vld [vmem:[#allocation5 + $0x80] sm:$0xff]
        %v338 = vld [vmem:[#allocation5 + $0x88] sm:$0xff]
        %v339 = vld [vmem:[#allocation5 + $0x90] sm:$0xff]
        %v340 = vld [vmem:[#allocation5 + $0x98] sm:$0xff]
        %v341 = vld [vmem:[#allocation5 + $0xa0] sm:$0xff]
        %v342 = vld [vmem:[#allocation5 + $0xa8] sm:$0xff]
        %v343 = vld [vmem:[#allocation5 + $0xb0] sm:$0xff]
        %v344 = vld [vmem:[#allocation5 + $0xb8] sm:$0xff]
        %v345 = vld [vmem:[%s2] sm:$0x3]
        %v347 = vlaneseq
        %v348 = vshrl.u32 %v347, 7
        %v349 = vsub.s32 0, %v348
        %v350 = vrot.slane %v345, %v349
        %v351 = vlaneseq
        %v352 = vshrl.u32 %v351, 7
        %v353 = vsub.s32 1, %v352
        %v354 = vrot.slane %v345, %v353
        %vm357 = vcmask 785408
        %v359 = vsel %vm357, %v313, 0
        %v362 = vsel %vm357, %v314, 0
        %v365 = vsel %vm357, %v315, 0
        %v368 = vsel %vm357, %v316, 0
        %v371 = vsel %vm357, %v317, 0
        %v374 = vsel %vm357, %v318, 0
        %v377 = vsel %vm357, %v319, 0
        %v380 = vsel %vm357, %v320, 0
        %382 = vmatprep.subr.mxu0 %v322
        %383 = vmatpush1.msra.mxu0 %v321
        %384 = vmatprep.subr.mxu0 %v324
        %385 = vmatpush1.msra.mxu0 %v323
        %386 = vmatprep.subr.mxu0 %v326
        %387 = vmatpush1.msra.mxu0 %v325
        %388 = vmatprep.subr.mxu0 %v328
        %389 = vmatpush1.msra.mxu0 %v327
        %390 = vmatprep.subr.mxu0 %v330
        %391 = vmatpush1.msra.mxu0 %v329
        %392 = vmatprep.subr.mxu0 %v332
        %393 = vmatpush1.msra.mxu0 %v331
        %394 = vmatprep.subr.mxu0 %v334
        %395 = vmatpush1.msra.mxu0 %v333
        %396 = vmatprep.subr.mxu0 %v336
        %397 = vmatpush1.msra.mxu0 %v335
        %398 = vmatprep.subr.mxu0 %v338
        %399 = vmatpush1.msra.mxu0 %v337
        %400 = vmatprep.subr.mxu0 %v340
        %401 = vmatpush1.msra.mxu0 %v339
        %402 = vmatprep.subr.mxu0 %v342
        %403 = vmatpush1.msra.mxu0 %v341
        %404 = vmatprep.subr.mxu0 %v344
        %405 = vmatpush1.msra.mxu0 %v343
        %406 = vmatprep.subr.mxu0 0.0
        %407 = vmatpush1.msra.mxu0 0.0
        %408 = vmatprep.subr.mxu0 0.0
        %409 = vmatpush1.msra.mxu0 0.0
        %410 = vmatprep.subr.mxu0 0.0
        %411 = vmatpush1.msra.mxu0 0.0
        %412 = vmatprep.subr.mxu0 0.0
        %413 = vmatpush1.msra.mxu0 0.0
        %414 = vmatprep.subr.mxu0 0.0
        %415 = vmatpush1.msra.mxu0 0.0
        %416 = vmatprep.subr.mxu0 0.0
        %417 = vmatpush1.msra.mxu0 0.0
        %418 = vmatprep.subr.mxu0 0.0
        %419 = vmatpush1.msra.mxu0 0.0
        %420 = vmatprep.subr.mxu0 0.0
        %421 = vmatpush1.msra.mxu0 0.0
        %422 = vmatprep.subr.mxu0 0.0
        %423 = vmatpush1.msra.mxu0 0.0
        %424 = vmatprep.subr.mxu0 0.0
        %425 = vmatpush1.msra.mxu0 0.0
        %426 = vmatprep.subr.mxu0 0.0
        %427 = vmatpush1.msra.mxu0 0.0
        %428 = vmatprep.subr.mxu0 0.0
        %429 = vmatpush1.msra.mxu0 0.0
        %430 = vmatprep.subr.mxu0 0.0
        %431 = vmatpush1.msra.mxu0 0.0
        %432 = vmatprep.subr.mxu0 0.0
        %433 = vmatpush1.msra.mxu0 0.0
        %434 = vmatprep.subr.mxu0 0.0
        %435 = vmatpush1.msra.mxu0 0.0
        %436 = vmatprep.subr.mxu0 0.0
        %437 = vmatpush1.msra.mxu0 0.0
        %438 = vmatprep.subr.mxu0 0.0
        %439 = vmatpush1.msra.mxu0 0.0
        %440 = vmatprep.subr.mxu0 0.0
        %441 = vmatpush1.msra.mxu0 0.0
        %442 = vmatprep.subr.mxu0 0.0
        %443 = vmatpush1.msra.mxu0 0.0
        %444 = vmatprep.subr.mxu0 0.0
        %445 = vmatpush1.msra.mxu0 0.0
        %446 = vmatprep.mubr.f32.mxu0 0.0
        %447 = vmatmul.mubr.f32.gmra.mrb[0].mxu0 %v359
        %v448 = vpop.f32.mrb[0].mxu0
        %v449 = vadd.f32 %v350, %v448
        %v450 = vpop.f32.mrb[0].mxu0
        %v451 = vadd.f32 %v354, %v450
        %452 = vmatprep.mubr.f32.mxu0 0.0
        %453 = vmatmul.mubr.f32.gmra.mrb[0].mxu0 %v362
        %v454 = vpop.f32.mrb[0].mxu0
        %v455 = vadd.f32 %v350, %v454
        %v456 = vpop.f32.mrb[0].mxu0
        %v457 = vadd.f32 %v354, %v456
        %458 = vmatprep.mubr.f32.mxu0 0.0
        %459 = vmatmul.mubr.f32.gmra.mrb[0].mxu0 %v365
        %v460 = vpop.f32.mrb[0].mxu0
        %v461 = vadd.f32 %v350, %v460
        %v462 = vpop.f32.mrb[0].mxu0
        %v463 = vadd.f32 %v354, %v462
        %464 = vmatprep.mubr.f32.mxu0 0.0
        %465 = vmatmul.mubr.f32.gmra.mrb[0].mxu0 %v368
        %v466 = vpop.f32.mrb[0].mxu0
        %v467 = vadd.f32 %v350, %v466
        %v468 = vpop.f32.mrb[0].mxu0
        %v469 = vadd.f32 %v354, %v468
        %470 = vmatprep.mubr.f32.mxu0 0.0
        %471 = vmatmul.mubr.f32.gmra.mrb[0].mxu0 %v371
        %v472 = vpop.f32.mrb[0].mxu0
        %v473 = vadd.f32 %v350, %v472
        %v474 = vpop.f32.mrb[0].mxu0
        %v475 = vadd.f32 %v354, %v474
        %476 = vmatprep.mubr.f32.mxu0 0.0
        %477 = vmatmul.mubr.f32.gmra.mrb[0].mxu0 %v374
        %v478 = vpop.f32.mrb[0].mxu0
        %v479 = vadd.f32 %v350, %v478
        %v480 = vpop.f32.mrb[0].mxu0
        %v481 = vadd.f32 %v354, %v480
        %482 = vmatprep.mubr.f32.mxu0 0.0
        %483 = vmatmul.mubr.f32.gmra.mrb[0].mxu0 %v377
        %v484 = vpop.f32.mrb[0].mxu0
        %v485 = vadd.f32 %v350, %v484
        %v486 = vpop.f32.mrb[0].mxu0
        %v487 = vadd.f32 %v354, %v486
        %488 = vmatprep.mubr.f32.mxu0 0.0
        %489 = vmatmul.mubr.f32.gmra.mrb[0].mxu0 %v380
        %v490 = vpop.f32.mrb[0].mxu0
        %v491 = vadd.f32 %v350, %v490
        %v492 = vpop.f32.mrb[0].mxu0
        %v493 = vadd.f32 %v354, %v492
        %494 = vdwg.mxu0
        %v495 = vld [vmem:[#allocation7] sm:$0xff]
        %v496 = vld [vmem:[#allocation7 + $0x8] sm:$0xff]
        %v497 = vld [vmem:[#allocation7 + $0x10] sm:$0xff]
        %v498 = vld [vmem:[#allocation7 + $0x18] sm:$0xff]
        %v499 = vld [vmem:[#allocation7 + $0x20] sm:$0xff]
        %v500 = vld [vmem:[#allocation7 + $0x28] sm:$0xff]
        %v501 = vld [vmem:[#allocation7 + $0x30] sm:$0xff]
        %v502 = vld [vmem:[#allocation7 + $0x38] sm:$0xff]
        %v503 = vld [vmem:[#allocation7 + $0x40] sm:$0xff]
        %v504 = vld [vmem:[#allocation7 + $0x48] sm:$0xff]
        %v505 = vld [vmem:[#allocation7 + $0x50] sm:$0xff]
        %v506 = vld [vmem:[#allocation7 + $0x58] sm:$0xff]
        %v507 = vld [vmem:[#allocation7 + $0x60] sm:$0xff]
        %v508 = vld [vmem:[#allocation7 + $0x68] sm:$0xff]
        %v509 = vld [vmem:[#allocation7 + $0x70] sm:$0xff]
        %v510 = vld [vmem:[#allocation7 + $0x78] sm:$0xff]
        %vm511 = vcmask 523264
        %v513 = vsel %vm511, 0.0, 0
        %515 = vmatprep.subr.mxu0 %v496
        %516 = vmatpush1.msra.mxu0 %v495
        %517 = vmatprep.subr.mxu0 %v498
        %518 = vmatpush1.msra.mxu0 %v497
        %519 = vmatprep.subr.mxu0 %v500
        %520 = vmatpush1.msra.mxu0 %v499
        %521 = vmatprep.subr.mxu0 %v502
        %522 = vmatpush1.msra.mxu0 %v501
        %523 = vmatprep.subr.mxu0 %v504
        %524 = vmatpush1.msra.mxu0 %v503
        %525 = vmatprep.subr.mxu0 %v506
        %526 = vmatpush1.msra.mxu0 %v505
        %527 = vmatprep.subr.mxu0 %v508
        %528 = vmatpush1.msra.mxu0 %v507
        %529 = vmatprep.subr.mxu0 %v510
        %530 = vmatpush1.msra.mxu0 %v509
        %531 = vmatprep.subr.mxu0 0.0
        %532 = vmatpush1.msra.mxu0 0.0
        %533 = vmatprep.subr.mxu0 0.0
        %534 = vmatpush1.msra.mxu0 0.0
        %535 = vmatprep.subr.mxu0 0.0
        %536 = vmatpush1.msra.mxu0 0.0
        %537 = vmatprep.subr.mxu0 0.0
        %538 = vmatpush1.msra.mxu0 0.0
        %539 = vmatprep.subr.mxu0 0.0
        %540 = vmatpush1.msra.mxu0 0.0
        %541 = vmatprep.subr.mxu0 0.0
        %542 = vmatpush1.msra.mxu0 0.0
        %543 = vmatprep.subr.mxu0 0.0
        %544 = vmatpush1.msra.mxu0 0.0
        %545 = vmatprep.subr.mxu0 0.0
        %546 = vmatpush1.msra.mxu0 0.0
        %547 = vmatprep.subr.mxu0 0.0
        %548 = vmatpush1.msra.mxu0 0.0
        %549 = vmatprep.subr.mxu0 0.0
        %550 = vmatpush1.msra.mxu0 0.0
        %551 = vmatprep.subr.mxu0 0.0
        %552 = vmatpush1.msra.mxu0 0.0
        %553 = vmatprep.subr.mxu0 0.0
        %554 = vmatpush1.msra.mxu0 0.0
        %555 = vmatprep.subr.mxu0 0.0
        %556 = vmatpush1.msra.mxu0 0.0
        %557 = vmatprep.subr.mxu0 0.0
        %558 = vmatpush1.msra.mxu0 0.0
        %559 = vmatprep.subr.mxu0 0.0
        %560 = vmatpush1.msra.mxu0 0.0
        %561 = vmatprep.subr.mxu0 0.0
        %562 = vmatpush1.msra.mxu0 0.0
        %563 = vmatprep.subr.mxu0 0.0
        %564 = vmatpush1.msra.mxu0 0.0
        %565 = vmatprep.subr.mxu0 0.0
        %566 = vmatpush1.msra.mxu0 0.0
        %567 = vmatprep.subr.mxu0 0.0
        %568 = vmatpush1.msra.mxu0 0.0
        %569 = vmatprep.subr.mxu0 0.0
        %570 = vmatpush1.msra.mxu0 0.0
        %571 = vmatprep.subr.mxu0 0.0
        %572 = vmatpush1.msra.mxu0 0.0
        %573 = vmatprep.subr.mxu0 0.0
        %574 = vmatpush1.msra.mxu0 0.0
        %575 = vmatprep.subr.mxu0 0.0
        %576 = vmatpush1.msra.mxu0 0.0
        %577 = vmatprep.subr.mxu0 0.0
        %578 = vmatpush1.msra.mxu0 0.0
        %579 = vmatprep.mubr.f32.mxu0 0.0
        %580 = vmatmul.mubr.f32.gmra.mrb[0].mxu0 %v513
        %v581 = vpop.f32.mrb[0].mxu0
        %v582 = vadd.f32 %v449, %v581
        %v583 = vpop.f32.mrb[0].mxu0
        %v584 = vadd.f32 %v451, %v583
        %585 = vdwg.mxu0
        %v586 = vxor.u32 %v582, 2147483648
        %v587 = vxor.u32 %v584, 2147483648
        %v588 = vmul.f32 %v586, 1.442695
        %v589 = vpow.pop %v588
        %v590 = vmul.f32 %v587, 1.442695
        %v591 = vpow.pop %v590
        %v592 = vadd.f32 %v589, 1.0
        %v593 = vadd.f32 %v591, 1.0
        %v594 = vrcp.pop %v592
        %v595 = vmul.f32 1.0, %v594
        %v596 = vrcp.pop %v593
        %v597 = vmul.f32 1.0, %v596
        %v598 = vtanh.pop %v584
        %v599 = vmul.f32 %v595, 0.0
        %601 = vrot.lane.b32.xlu0 %v598, 64
        %v602 = vpop.permute.xlu0 %601
        %v604 = vmul.f32 %v595, %v602
        %606 = vrot.lane.b32.xlu0 %v604, 64
        %v607 = vpop.permute.xlu0 %606
        %v609 = vadd.f32 %v599, %v607
        %v610 = vtanh.pop %v609
        %612 = vrot.lane.b32.xlu0 %v610, 64
        %v613 = vpop.permute.xlu0 %612
        %v615 = vmul.f32 %v597, %v613
        %v617 = vsel %vm511, %v615, 0
        %619 = vmatprep.subr.mxu0 %v496
        %620 = vmatpush1.msra.mxu0 %v495
        %621 = vmatprep.subr.mxu0 %v498
        %622 = vmatpush1.msra.mxu0 %v497
        %623 = vmatprep.subr.mxu0 %v500
        %624 = vmatpush1.msra.mxu0 %v499
        %625 = vmatprep.subr.mxu0 %v502
        %626 = vmatpush1.msra.mxu0 %v501
        %627 = vmatprep.subr.mxu0 %v504
        %628 = vmatpush1.msra.mxu0 %v503
        %629 = vmatprep.subr.mxu0 %v506
        %630 = vmatpush1.msra.mxu0 %v505
        %631 = vmatprep.subr.mxu0 %v508
        %632 = vmatpush1.msra.mxu0 %v507
        %633 = vmatprep.subr.mxu0 %v510
        %634 = vmatpush1.msra.mxu0 %v509
        %635 = vmatprep.subr.mxu0 0.0
        %636 = vmatpush1.msra.mxu0 0.0
        %637 = vmatprep.subr.mxu0 0.0
        %638 = vmatpush1.msra.mxu0 0.0
        %639 = vmatprep.subr.mxu0 0.0
        %640 = vmatpush1.msra.mxu0 0.0
        %641 = vmatprep.subr.mxu0 0.0
        %642 = vmatpush1.msra.mxu0 0.0
        %643 = vmatprep.subr.mxu0 0.0
        %644 = vmatpush1.msra.mxu0 0.0
        %645 = vmatprep.subr.mxu0 0.0
        %646 = vmatpush1.msra.mxu0 0.0
        %647 = vmatprep.subr.mxu0 0.0
        %648 = vmatpush1.msra.mxu0 0.0
        %649 = vmatprep.subr.mxu0 0.0
        %650 = vmatpush1.msra.mxu0 0.0
        %651 = vmatprep.subr.mxu0 0.0
        %652 = vmatpush1.msra.mxu0 0.0
        %653 = vmatprep.subr.mxu0 0.0
        %654 = vmatpush1.msra.mxu0 0.0
        %655 = vmatprep.subr.mxu0 0.0
        %656 = vmatpush1.msra.mxu0 0.0
        %657 = vmatprep.subr.mxu0 0.0
        %658 = vmatpush1.msra.mxu0 0.0
        %659 = vmatprep.subr.mxu0 0.0
        %660 = vmatpush1.msra.mxu0 0.0
        %661 = vmatprep.subr.mxu0 0.0
        %662 = vmatpush1.msra.mxu0 0.0
        %663 = vmatprep.subr.mxu0 0.0
        %664 = vmatpush1.msra.mxu0 0.0
        %665 = vmatprep.subr.mxu0 0.0
        %666 = vmatpush1.msra.mxu0 0.0
        %667 = vmatprep.subr.mxu0 0.0
        %668 = vmatpush1.msra.mxu0 0.0
        %669 = vmatprep.subr.mxu0 0.0
        %670 = vmatpush1.msra.mxu0 0.0
        %671 = vmatprep.subr.mxu0 0.0
        %672 = vmatpush1.msra.mxu0 0.0
        %673 = vmatprep.subr.mxu0 0.0
        %674 = vmatpush1.msra.mxu0 0.0
        %675 = vmatprep.subr.mxu0 0.0
        %676 = vmatpush1.msra.mxu0 0.0
        %677 = vmatprep.subr.mxu0 0.0
        %678 = vmatpush1.msra.mxu0 0.0
        %679 = vmatprep.subr.mxu0 0.0
        %680 = vmatpush1.msra.mxu0 0.0
        %681 = vmatprep.subr.mxu0 0.0
        %682 = vmatpush1.msra.mxu0 0.0
        %683 = vmatprep.mubr.f32.mxu0 0.0
        %684 = vmatmul.mubr.f32.gmra.mrb[0].mxu0 %v617
        %v685 = vpop.f32.mrb[0].mxu0
        %v686 = vadd.f32 %v455, %v685
        %v687 = vpop.f32.mrb[0].mxu0
        %v688 = vadd.f32 %v457, %v687
        %689 = vdwg.mxu0
        %v690 = vxor.u32 %v686, 2147483648
        %v691 = vxor.u32 %v688, 2147483648
        %v692 = vmul.f32 %v690, 1.442695
        %v693 = vpow.pop %v692
        %v694 = vmul.f32 %v691, 1.442695
        %v695 = vpow.pop %v694
        %v696 = vadd.f32 %v693, 1.0
        %v697 = vadd.f32 %v695, 1.0
        %v698 = vrcp.pop %v696
        %v699 = vmul.f32 1.0, %v698
        %v700 = vrcp.pop %v697
        %v701 = vmul.f32 1.0, %v700
        %v702 = vtanh.pop %v688
        %v703 = vmul.f32 %v699, %v609
        %705 = vrot.lane.b32.xlu0 %v702, 64
        %v706 = vpop.permute.xlu0 %705
        %v708 = vmul.f32 %v699, %v706
        %710 = vrot.lane.b32.xlu0 %v708, 64
        %v711 = vpop.permute.xlu0 %710
        %v713 = vadd.f32 %v703, %v711
        %v714 = vtanh.pop %v713
        %716 = vrot.lane.b32.xlu0 %v714, 64
        %v717 = vpop.permute.xlu0 %716
        %v719 = vmul.f32 %v701, %v717
        %v721 = vsel %vm511, %v719, 0
        %723 = vmatprep.subr.mxu0 %v496
        %724 = vmatpush1.msra.mxu0 %v495
        %725 = vmatprep.subr.mxu0 %v498
        %726 = vmatpush1.msra.mxu0 %v497
        %727 = vmatprep.subr.mxu0 %v500
        %728 = vmatpush1.msra.mxu0 %v499
        %729 = vmatprep.subr.mxu0 %v502
        %730 = vmatpush1.msra.mxu0 %v501
        %731 = vmatprep.subr.mxu0 %v504
        %732 = vmatpush1.msra.mxu0 %v503
        %733 = vmatprep.subr.mxu0 %v506
        %734 = vmatpush1.msra.mxu0 %v505
        %735 = vmatprep.subr.mxu0 %v508
        %736 = vmatpush1.msra.mxu0 %v507
        %737 = vmatprep.subr.mxu0 %v510
        %738 = vmatpush1.msra.mxu0 %v509
        %739 = vmatprep.subr.mxu0 0.0
        %740 = vmatpush1.msra.mxu0 0.0
        %741 = vmatprep.subr.mxu0 0.0
        %742 = vmatpush1.msra.mxu0 0.0
        %743 = vmatprep.subr.mxu0 0.0
        %744 = vmatpush1.msra.mxu0 0.0
        %745 = vmatprep.subr.mxu0 0.0
        %746 = vmatpush1.msra.mxu0 0.0
        %747 = vmatprep.subr.mxu0 0.0
        %748 = vmatpush1.msra.mxu0 0.0
        %749 = vmatprep.subr.mxu0 0.0
        %750 = vmatpush1.msra.mxu0 0.0
        %751 = vmatprep.subr.mxu0 0.0
        %752 = vmatpush1.msra.mxu0 0.0
        %753 = vmatprep.subr.mxu0 0.0
        %754 = vmatpush1.msra.mxu0 0.0
        %755 = vmatprep.subr.mxu0 0.0
        %756 = vmatpush1.msra.mxu0 0.0
        %757 = vmatprep.subr.mxu0 0.0
        %758 = vmatpush1.msra.mxu0 0.0
        %759 = vmatprep.subr.mxu0 0.0
        %760 = vmatpush1.msra.mxu0 0.0
        %761 = vmatprep.subr.mxu0 0.0
        %762 = vmatpush1.msra.mxu0 0.0
        %763 = vmatprep.subr.mxu0 0.0
        %764 = vmatpush1.msra.mxu0 0.0
        %765 = vmatprep.subr.mxu0 0.0
        %766 = vmatpush1.msra.mxu0 0.0
        %767 = vmatprep.subr.mxu0 0.0
        %768 = vmatpush1.msra.mxu0 0.0
        %769 = vmatprep.subr.mxu0 0.0
        %770 = vmatpush1.msra.mxu0 0.0
        %771 = vmatprep.subr.mxu0 0.0
        %772 = vmatpush1.msra.mxu0 0.0
        %773 = vmatprep.subr.mxu0 0.0
        %774 = vmatpush1.msra.mxu0 0.0
        %775 = vmatprep.subr.mxu0 0.0
        %776 = vmatpush1.msra.mxu0 0.0
        %777 = vmatprep.subr.mxu0 0.0
        %778 = vmatpush1.msra.mxu0 0.0
        %779 = vmatprep.subr.mxu0 0.0
        %780 = vmatpush1.msra.mxu0 0.0
        %781 = vmatprep.subr.mxu0 0.0
        %782 = vmatpush1.msra.mxu0 0.0
        %783 = vmatprep.subr.mxu0 0.0
        %784 = vmatpush1.msra.mxu0 0.0
        %785 = vmatprep.subr.mxu0 0.0
        %786 = vmatpush1.msra.mxu0 0.0
        %787 = vmatprep.mubr.f32.mxu0 0.0
        %788 = vmatmul.mubr.f32.gmra.mrb[0].mxu0 %v721
        %v789 = vpop.f32.mrb[0].mxu0
        %v790 = vadd.f32 %v461, %v789
        %v791 = vpop.f32.mrb[0].mxu0
        %v792 = vadd.f32 %v463, %v791
        %793 = vdwg.mxu0
        %v794 = vxor.u32 %v790, 2147483648
        %v795 = vxor.u32 %v792, 2147483648
        %v796 = vmul.f32 %v794, 1.442695
        %v797 = vpow.pop %v796
        %v798 = vmul.f32 %v795, 1.442695
        %v799 = vpow.pop %v798
        %v800 = vadd.f32 %v797, 1.0
        %v801 = vadd.f32 %v799, 1.0
        %v802 = vrcp.pop %v800
        %v803 = vmul.f32 1.0, %v802
        %v804 = vrcp.pop %v801
        %v805 = vmul.f32 1.0, %v804
        %v806 = vtanh.pop %v792
        %v807 = vmul.f32 %v803, %v713
        %809 = vrot.lane.b32.xlu0 %v806, 64
        %v810 = vpop.permute.xlu0 %809
        %v812 = vmul.f32 %v803, %v810
        %814 = vrot.lane.b32.xlu0 %v812, 64
        %v815 = vpop.permute.xlu0 %814
        %v817 = vadd.f32 %v807, %v815
        %v818 = vtanh.pop %v817
        %820 = vrot.lane.b32.xlu0 %v818, 64
        %v821 = vpop.permute.xlu0 %820
        %v823 = vmul.f32 %v805, %v821
        %v825 = vsel %vm511, %v823, 0
        %827 = vmatprep.subr.mxu0 %v496
        %828 = vmatpush1.msra.mxu0 %v495
        %829 = vmatprep.subr.mxu0 %v498
        %830 = vmatpush1.msra.mxu0 %v497
        %831 = vmatprep.subr.mxu0 %v500
        %832 = vmatpush1.msra.mxu0 %v499
        %833 = vmatprep.subr.mxu0 %v502
        %834 = vmatpush1.msra.mxu0 %v501
        %835 = vmatprep.subr.mxu0 %v504
        %836 = vmatpush1.msra.mxu0 %v503
        %837 = vmatprep.subr.mxu0 %v506
        %838 = vmatpush1.msra.mxu0 %v505
        %839 = vmatprep.subr.mxu0 %v508
        %840 = vmatpush1.msra.mxu0 %v507
        %841 = vmatprep.subr.mxu0 %v510
        %842 = vmatpush1.msra.mxu0 %v509
        %843 = vmatprep.subr.mxu0 0.0
        %844 = vmatpush1.msra.mxu0 0.0
        %845 = vmatprep.subr.mxu0 0.0
        %846 = vmatpush1.msra.mxu0 0.0
        %847 = vmatprep.subr.mxu0 0.0
        %848 = vmatpush1.msra.mxu0 0.0
        %849 = vmatprep.subr.mxu0 0.0
        %850 = vmatpush1.msra.mxu0 0.0
        %851 = vmatprep.subr.mxu0 0.0
        %852 = vmatpush1.msra.mxu0 0.0
        %853 = vmatprep.subr.mxu0 0.0
        %854 = vmatpush1.msra.mxu0 0.0
        %855 = vmatprep.subr.mxu0 0.0
        %856 = vmatpush1.msra.mxu0 0.0
        %857 = vmatprep.subr.mxu0 0.0
        %858 = vmatpush1.msra.mxu0 0.0
        %859 = vmatprep.subr.mxu0 0.0
        %860 = vmatpush1.msra.mxu0 0.0
        %861 = vmatprep.subr.mxu0 0.0
        %862 = vmatpush1.msra.mxu0 0.0
        %863 = vmatprep.subr.mxu0 0.0
        %864 = vmatpush1.msra.mxu0 0.0
        %865 = vmatprep.subr.mxu0 0.0
        %866 = vmatpush1.msra.mxu0 0.0
        %867 = vmatprep.subr.mxu0 0.0
        %868 = vmatpush1.msra.mxu0 0.0
        %869 = vmatprep.subr.mxu0 0.0
        %870 = vmatpush1.msra.mxu0 0.0
        %871 = vmatprep.subr.mxu0 0.0
        %872 = vmatpush1.msra.mxu0 0.0
        %873 = vmatprep.subr.mxu0 0.0
        %874 = vmatpush1.msra.mxu0 0.0
        %875 = vmatprep.subr.mxu0 0.0
        %876 = vmatpush1.msra.mxu0 0.0
        %877 = vmatprep.subr.mxu0 0.0
        %878 = vmatpush1.msra.mxu0 0.0
        %879 = vmatprep.subr.mxu0 0.0
        %880 = vmatpush1.msra.mxu0 0.0
        %881 = vmatprep.subr.mxu0 0.0
        %882 = vmatpush1.msra.mxu0 0.0
        %883 = vmatprep.subr.mxu0 0.0
        %884 = vmatpush1.msra.mxu0 0.0
        %885 = vmatprep.subr.mxu0 0.0
        %886 = vmatpush1.msra.mxu0 0.0
        %887 = vmatprep.subr.mxu0 0.0
        %888 = vmatpush1.msra.mxu0 0.0
        %889 = vmatprep.subr.mxu0 0.0
        %890 = vmatpush1.msra.mxu0 0.0
        %891 = vmatprep.mubr.f32.mxu0 0.0
        %892 = vmatmul.mubr.f32.gmra.mrb[0].mxu0 %v825
        %v893 = vpop.f32.mrb[0].mxu0
        %v894 = vadd.f32 %v467, %v893
        %v895 = vpop.f32.mrb[0].mxu0
        %v896 = vadd.f32 %v469, %v895
        %897 = vdwg.mxu0
        %v898 = vxor.u32 %v894, 2147483648
        %v899 = vxor.u32 %v896, 2147483648
        %v900 = vmul.f32 %v898, 1.442695
        %v901 = vpow.pop %v900
        %v902 = vmul.f32 %v899, 1.442695
        %v903 = vpow.pop %v902
        %v904 = vadd.f32 %v901, 1.0
        %v905 = vadd.f32 %v903, 1.0
        %v906 = vrcp.pop %v904
        %v907 = vmul.f32 1.0, %v906
        %v908 = vrcp.pop %v905
        %v909 = vmul.f32 1.0, %v908
        %v910 = vtanh.pop %v896
        %v911 = vmul.f32 %v907, %v817
        %913 = vrot.lane.b32.xlu0 %v910, 64
        %v914 = vpop.permute.xlu0 %913
        %v916 = vmul.f32 %v907, %v914
        %918 = vrot.lane.b32.xlu0 %v916, 64
        %v919 = vpop.permute.xlu0 %918
        %v921 = vadd.f32 %v911, %v919
        %v922 = vtanh.pop %v921
        %924 = vrot.lane.b32.xlu0 %v922, 64
        %v925 = vpop.permute.xlu0 %924
        %v927 = vmul.f32 %v909, %v925
        %v929 = vsel %vm511, %v927, 0
        %931 = vmatprep.subr.mxu0 %v496
        %932 = vmatpush1.msra.mxu0 %v495
        %933 = vmatprep.subr.mxu0 %v498
        %934 = vmatpush1.msra.mxu0 %v497
        %935 = vmatprep.subr.mxu0 %v500
        %936 = vmatpush1.msra.mxu0 %v499
        %937 = vmatprep.subr.mxu0 %v502
        %938 = vmatpush1.msra.mxu0 %v501
        %939 = vmatprep.subr.mxu0 %v504
        %940 = vmatpush1.msra.mxu0 %v503
        %941 = vmatprep.subr.mxu0 %v506
        %942 = vmatpush1.msra.mxu0 %v505
        %943 = vmatprep.subr.mxu0 %v508
        %944 = vmatpush1.msra.mxu0 %v507
        %945 = vmatprep.subr.mxu0 %v510
        %946 = vmatpush1.msra.mxu0 %v509
        %947 = vmatprep.subr.mxu0 0.0
        %948 = vmatpush1.msra.mxu0 0.0
        %949 = vmatprep.subr.mxu0 0.0
        %950 = vmatpush1.msra.mxu0 0.0
        %951 = vmatprep.subr.mxu0 0.0
        %952 = vmatpush1.msra.mxu0 0.0
        %953 = vmatprep.subr.mxu0 0.0
        %954 = vmatpush1.msra.mxu0 0.0
        %955 = vmatprep.subr.mxu0 0.0
        %956 = vmatpush1.msra.mxu0 0.0
        %957 = vmatprep.subr.mxu0 0.0
        %958 = vmatpush1.msra.mxu0 0.0
        %959 = vmatprep.subr.mxu0 0.0
        %960 = vmatpush1.msra.mxu0 0.0
        %961 = vmatprep.subr.mxu0 0.0
        %962 = vmatpush1.msra.mxu0 0.0
        %963 = vmatprep.subr.mxu0 0.0
        %964 = vmatpush1.msra.mxu0 0.0
        %965 = vmatprep.subr.mxu0 0.0
        %966 = vmatpush1.msra.mxu0 0.0
        %967 = vmatprep.subr.mxu0 0.0
        %968 = vmatpush1.msra.mxu0 0.0
        %969 = vmatprep.subr.mxu0 0.0
        %970 = vmatpush1.msra.mxu0 0.0
        %971 = vmatprep.subr.mxu0 0.0
        %972 = vmatpush1.msra.mxu0 0.0
        %973 = vmatprep.subr.mxu0 0.0
        %974 = vmatpush1.msra.mxu0 0.0
        %975 = vmatprep.subr.mxu0 0.0
        %976 = vmatpush1.msra.mxu0 0.0
        %977 = vmatprep.subr.mxu0 0.0
        %978 = vmatpush1.msra.mxu0 0.0
        %979 = vmatprep.subr.mxu0 0.0
        %980 = vmatpush1.msra.mxu0 0.0
        %981 = vmatprep.subr.mxu0 0.0
        %982 = vmatpush1.msra.mxu0 0.0
        %983 = vmatprep.subr.mxu0 0.0
        %984 = vmatpush1.msra.mxu0 0.0
        %985 = vmatprep.subr.mxu0 0.0
        %986 = vmatpush1.msra.mxu0 0.0
        %987 = vmatprep.subr.mxu0 0.0
        %988 = vmatpush1.msra.mxu0 0.0
        %989 = vmatprep.subr.mxu0 0.0
        %990 = vmatpush1.msra.mxu0 0.0
        %991 = vmatprep.subr.mxu0 0.0
        %992 = vmatpush1.msra.mxu0 0.0
        %993 = vmatprep.subr.mxu0 0.0
        %994 = vmatpush1.msra.mxu0 0.0
        %995 = vmatprep.mubr.f32.mxu0 0.0
        %996 = vmatmul.mubr.f32.gmra.mrb[0].mxu0 %v929
        %v997 = vpop.f32.mrb[0].mxu0
        %v998 = vadd.f32 %v473, %v997
        %v999 = vpop.f32.mrb[0].mxu0
        %v1000 = vadd.f32 %v475, %v999
        %1001 = vdwg.mxu0
        %v1002 = vxor.u32 %v998, 2147483648
        %v1003 = vxor.u32 %v1000, 2147483648
        %v1004 = vmul.f32 %v1002, 1.442695
        %v1005 = vpow.pop %v1004
        %v1006 = vmul.f32 %v1003, 1.442695
        %v1007 = vpow.pop %v1006
        %v1008 = vadd.f32 %v1005, 1.0
        %v1009 = vadd.f32 %v1007, 1.0
        %v1010 = vrcp.pop %v1008
        %v1011 = vmul.f32 1.0, %v1010
        %v1012 = vrcp.pop %v1009
        %v1013 = vmul.f32 1.0, %v1012
        %v1014 = vtanh.pop %v1000
        %v1015 = vmul.f32 %v1011, %v921
        %1017 = vrot.lane.b32.xlu0 %v1014, 64
        %v1018 = vpop.permute.xlu0 %1017
        %v1020 = vmul.f32 %v1011, %v1018
        %1022 = vrot.lane.b32.xlu0 %v1020, 64
        %v1023 = vpop.permute.xlu0 %1022
        %v1025 = vadd.f32 %v1015, %v1023
        %v1026 = vtanh.pop %v1025
        %1028 = vrot.lane.b32.xlu0 %v1026, 64
        %v1029 = vpop.permute.xlu0 %1028
        %v1031 = vmul.f32 %v1013, %v1029
        %v1033 = vsel %vm511, %v1031, 0
        %1035 = vmatprep.subr.mxu0 %v496
        %1036 = vmatpush1.msra.mxu0 %v495
        %1037 = vmatprep.subr.mxu0 %v498
        %1038 = vmatpush1.msra.mxu0 %v497
        %1039 = vmatprep.subr.mxu0 %v500
        %1040 = vmatpush1.msra.mxu0 %v499
        %1041 = vmatprep.subr.mxu0 %v502
        %1042 = vmatpush1.msra.mxu0 %v501
        %1043 = vmatprep.subr.mxu0 %v504
        %1044 = vmatpush1.msra.mxu0 %v503
        %1045 = vmatprep.subr.mxu0 %v506
        %1046 = vmatpush1.msra.mxu0 %v505
        %1047 = vmatprep.subr.mxu0 %v508
        %1048 = vmatpush1.msra.mxu0 %v507
        %1049 = vmatprep.subr.mxu0 %v510
        %1050 = vmatpush1.msra.mxu0 %v509
        %1051 = vmatprep.subr.mxu0 0.0
        %1052 = vmatpush1.msra.mxu0 0.0
        %1053 = vmatprep.subr.mxu0 0.0
        %1054 = vmatpush1.msra.mxu0 0.0
        %1055 = vmatprep.subr.mxu0 0.0
        %1056 = vmatpush1.msra.mxu0 0.0
        %1057 = vmatprep.subr.mxu0 0.0
        %1058 = vmatpush1.msra.mxu0 0.0
        %1059 = vmatprep.subr.mxu0 0.0
        %1060 = vmatpush1.msra.mxu0 0.0
        %1061 = vmatprep.subr.mxu0 0.0
        %1062 = vmatpush1.msra.mxu0 0.0
        %1063 = vmatprep.subr.mxu0 0.0
        %1064 = vmatpush1.msra.mxu0 0.0
        %1065 = vmatprep.subr.mxu0 0.0
        %1066 = vmatpush1.msra.mxu0 0.0
        %1067 = vmatprep.subr.mxu0 0.0
        %1068 = vmatpush1.msra.mxu0 0.0
        %1069 = vmatprep.subr.mxu0 0.0
        %1070 = vmatpush1.msra.mxu0 0.0
        %1071 = vmatprep.subr.mxu0 0.0
        %1072 = vmatpush1.msra.mxu0 0.0
        %1073 = vmatprep.subr.mxu0 0.0
        %1074 = vmatpush1.msra.mxu0 0.0
        %1075 = vmatprep.subr.mxu0 0.0
        %1076 = vmatpush1.msra.mxu0 0.0
        %1077 = vmatprep.subr.mxu0 0.0
        %1078 = vmatpush1.msra.mxu0 0.0
        %1079 = vmatprep.subr.mxu0 0.0
        %1080 = vmatpush1.msra.mxu0 0.0
        %1081 = vmatprep.subr.mxu0 0.0
        %1082 = vmatpush1.msra.mxu0 0.0
        %1083 = vmatprep.subr.mxu0 0.0
        %1084 = vmatpush1.msra.mxu0 0.0
        %1085 = vmatprep.subr.mxu0 0.0
        %1086 = vmatpush1.msra.mxu0 0.0
        %1087 = vmatprep.subr.mxu0 0.0
        %1088 = vmatpush1.msra.mxu0 0.0
        %1089 = vmatprep.subr.mxu0 0.0
        %1090 = vmatpush1.msra.mxu0 0.0
        %1091 = vmatprep.subr.mxu0 0.0
        %1092 = vmatpush1.msra.mxu0 0.0
        %1093 = vmatprep.subr.mxu0 0.0
        %1094 = vmatpush1.msra.mxu0 0.0
        %1095 = vmatprep.subr.mxu0 0.0
        %1096 = vmatpush1.msra.mxu0 0.0
        %1097 = vmatprep.subr.mxu0 0.0
        %1098 = vmatpush1.msra.mxu0 0.0
        %1099 = vmatprep.mubr.f32.mxu0 0.0
        %1100 = vmatmul.mubr.f32.gmra.mrb[0].mxu0 %v1033
        %v1101 = vpop.f32.mrb[0].mxu0
        %v1102 = vadd.f32 %v479, %v1101
        %v1103 = vpop.f32.mrb[0].mxu0
        %v1104 = vadd.f32 %v481, %v1103
        %1105 = vdwg.mxu0
        %v1106 = vxor.u32 %v1102, 2147483648
        %v1107 = vxor.u32 %v1104, 2147483648
        %v1108 = vmul.f32 %v1106, 1.442695
        %v1109 = vpow.pop %v1108
        %v1110 = vmul.f32 %v1107, 1.442695
        %v1111 = vpow.pop %v1110
        %v1112 = vadd.f32 %v1109, 1.0
        %v1113 = vadd.f32 %v1111, 1.0
        %v1114 = vrcp.pop %v1112
        %v1115 = vmul.f32 1.0, %v1114
        %v1116 = vrcp.pop %v1113
        %v1117 = vmul.f32 1.0, %v1116
        %v1118 = vtanh.pop %v1104
        %v1119 = vmul.f32 %v1115, %v1025
        %1121 = vrot.lane.b32.xlu0 %v1118, 64
        %v1122 = vpop.permute.xlu0 %1121
        %v1124 = vmul.f32 %v1115, %v1122
        %1126 = vrot.lane.b32.xlu0 %v1124, 64
        %v1127 = vpop.permute.xlu0 %1126
        %v1129 = vadd.f32 %v1119, %v1127
        %v1130 = vtanh.pop %v1129
        %1132 = vrot.lane.b32.xlu0 %v1130, 64
        %v1133 = vpop.permute.xlu0 %1132
        %v1135 = vmul.f32 %v1117, %v1133
        %v1137 = vsel %vm511, %v1135, 0
        %1139 = vmatprep.subr.mxu0 %v496
        %1140 = vmatpush1.msra.mxu0 %v495
        %1141 = vmatprep.subr.mxu0 %v498
        %1142 = vmatpush1.msra.mxu0 %v497
        %1143 = vmatprep.subr.mxu0 %v500
        %1144 = vmatpush1.msra.mxu0 %v499
        %1145 = vmatprep.subr.mxu0 %v502
        %1146 = vmatpush1.msra.mxu0 %v501
        %1147 = vmatprep.subr.mxu0 %v504
        %1148 = vmatpush1.msra.mxu0 %v503
        %1149 = vmatprep.subr.mxu0 %v506
        %1150 = vmatpush1.msra.mxu0 %v505
        %1151 = vmatprep.subr.mxu0 %v508
        %1152 = vmatpush1.msra.mxu0 %v507
        %1153 = vmatprep.subr.mxu0 %v510
        %1154 = vmatpush1.msra.mxu0 %v509
        %1155 = vmatprep.subr.mxu0 0.0
        %1156 = vmatpush1.msra.mxu0 0.0
        %1157 = vmatprep.subr.mxu0 0.0
        %1158 = vmatpush1.msra.mxu0 0.0
        %1159 = vmatprep.subr.mxu0 0.0
        %1160 = vmatpush1.msra.mxu0 0.0
        %1161 = vmatprep.subr.mxu0 0.0
        %1162 = vmatpush1.msra.mxu0 0.0
        %1163 = vmatprep.subr.mxu0 0.0
        %1164 = vmatpush1.msra.mxu0 0.0
        %1165 = vmatprep.subr.mxu0 0.0
        %1166 = vmatpush1.msra.mxu0 0.0
        %1167 = vmatprep.subr.mxu0 0.0
        %1168 = vmatpush1.msra.mxu0 0.0
        %1169 = vmatprep.subr.mxu0 0.0
        %1170 = vmatpush1.msra.mxu0 0.0
        %1171 = vmatprep.subr.mxu0 0.0
        %1172 = vmatpush1.msra.mxu0 0.0
        %1173 = vmatprep.subr.mxu0 0.0
        %1174 = vmatpush1.msra.mxu0 0.0
        %1175 = vmatprep.subr.mxu0 0.0
        %1176 = vmatpush1.msra.mxu0 0.0
        %1177 = vmatprep.subr.mxu0 0.0
        %1178 = vmatpush1.msra.mxu0 0.0
        %1179 = vmatprep.subr.mxu0 0.0
        %1180 = vmatpush1.msra.mxu0 0.0
        %1181 = vmatprep.subr.mxu0 0.0
        %1182 = vmatpush1.msra.mxu0 0.0
        %1183 = vmatprep.subr.mxu0 0.0
        %1184 = vmatpush1.msra.mxu0 0.0
        %1185 = vmatprep.subr.mxu0 0.0
        %1186 = vmatpush1.msra.mxu0 0.0
        %1187 = vmatprep.subr.mxu0 0.0
        %1188 = vmatpush1.msra.mxu0 0.0
        %1189 = vmatprep.subr.mxu0 0.0
        %1190 = vmatpush1.msra.mxu0 0.0
        %1191 = vmatprep.subr.mxu0 0.0
        %1192 = vmatpush1.msra.mxu0 0.0
        %1193 = vmatprep.subr.mxu0 0.0
        %1194 = vmatpush1.msra.mxu0 0.0
        %1195 = vmatprep.subr.mxu0 0.0
        %1196 = vmatpush1.msra.mxu0 0.0
        %1197 = vmatprep.subr.mxu0 0.0
        %1198 = vmatpush1.msra.mxu0 0.0
        %1199 = vmatprep.subr.mxu0 0.0
        %1200 = vmatpush1.msra.mxu0 0.0
        %1201 = vmatprep.subr.mxu0 0.0
        %1202 = vmatpush1.msra.mxu0 0.0
        %1203 = vmatprep.mubr.f32.mxu0 0.0
        %1204 = vmatmul.mubr.f32.gmra.mrb[0].mxu0 %v1137
        %v1205 = vpop.f32.mrb[0].mxu0
        %v1206 = vadd.f32 %v485, %v1205
        %v1207 = vpop.f32.mrb[0].mxu0
        %v1208 = vadd.f32 %v487, %v1207
        %1209 = vdwg.mxu0
        %v1210 = vxor.u32 %v1206, 2147483648
        %v1211 = vxor.u32 %v1208, 2147483648
        %v1212 = vmul.f32 %v1210, 1.442695
        %v1213 = vpow.pop %v1212
        %v1214 = vmul.f32 %v1211, 1.442695
        %v1215 = vpow.pop %v1214
        %v1216 = vadd.f32 %v1213, 1.0
        %v1217 = vadd.f32 %v1215, 1.0
        %v1218 = vrcp.pop %v1216
        %v1219 = vmul.f32 1.0, %v1218
        %v1220 = vrcp.pop %v1217
        %v1221 = vmul.f32 1.0, %v1220
        %v1222 = vtanh.pop %v1208
        %v1223 = vmul.f32 %v1219, %v1129
        %1225 = vrot.lane.b32.xlu0 %v1222, 64
        %v1226 = vpop.permute.xlu0 %1225
        %v1228 = vmul.f32 %v1219, %v1226
        %1230 = vrot.lane.b32.xlu0 %v1228, 64
        %v1231 = vpop.permute.xlu0 %1230
        %v1233 = vadd.f32 %v1223, %v1231
        %v1234 = vtanh.pop %v1233
        %1236 = vrot.lane.b32.xlu0 %v1234, 64
        %v1237 = vpop.permute.xlu0 %1236
        %v1239 = vmul.f32 %v1221, %v1237
        %v1241 = vsel %vm511, %v1239, 0
        %1243 = vmatprep.subr.mxu0 %v496
        %1244 = vmatpush1.msra.mxu0 %v495
        %1245 = vmatprep.subr.mxu0 %v498
        %1246 = vmatpush1.msra.mxu0 %v497
        %1247 = vmatprep.subr.mxu0 %v500
        %1248 = vmatpush1.msra.mxu0 %v499
        %1249 = vmatprep.subr.mxu0 %v502
        %1250 = vmatpush1.msra.mxu0 %v501
        %1251 = vmatprep.subr.mxu0 %v504
        %1252 = vmatpush1.msra.mxu0 %v503
        %1253 = vmatprep.subr.mxu0 %v506
        %1254 = vmatpush1.msra.mxu0 %v505
        %1255 = vmatprep.subr.mxu0 %v508
        %1256 = vmatpush1.msra.mxu0 %v507
        %1257 = vmatprep.subr.mxu0 %v510
        %1258 = vmatpush1.msra.mxu0 %v509
        %1259 = vmatprep.subr.mxu0 0.0
        %1260 = vmatpush1.msra.mxu0 0.0
        %1261 = vmatprep.subr.mxu0 0.0
        %1262 = vmatpush1.msra.mxu0 0.0
        %1263 = vmatprep.subr.mxu0 0.0
        %1264 = vmatpush1.msra.mxu0 0.0
        %1265 = vmatprep.subr.mxu0 0.0
        %1266 = vmatpush1.msra.mxu0 0.0
        %1267 = vmatprep.subr.mxu0 0.0
        %1268 = vmatpush1.msra.mxu0 0.0
        %1269 = vmatprep.subr.mxu0 0.0
        %1270 = vmatpush1.msra.mxu0 0.0
        %1271 = vmatprep.subr.mxu0 0.0
        %1272 = vmatpush1.msra.mxu0 0.0
        %1273 = vmatprep.subr.mxu0 0.0
        %1274 = vmatpush1.msra.mxu0 0.0
        %1275 = vmatprep.subr.mxu0 0.0
        %1276 = vmatpush1.msra.mxu0 0.0
        %1277 = vmatprep.subr.mxu0 0.0
        %1278 = vmatpush1.msra.mxu0 0.0
        %1279 = vmatprep.subr.mxu0 0.0
        %1280 = vmatpush1.msra.mxu0 0.0
        %1281 = vmatprep.subr.mxu0 0.0
        %1282 = vmatpush1.msra.mxu0 0.0
        %1283 = vmatprep.subr.mxu0 0.0
        %1284 = vmatpush1.msra.mxu0 0.0
        %1285 = vmatprep.subr.mxu0 0.0
        %1286 = vmatpush1.msra.mxu0 0.0
        %1287 = vmatprep.subr.mxu0 0.0
        %1288 = vmatpush1.msra.mxu0 0.0
        %1289 = vmatprep.subr.mxu0 0.0
        %1290 = vmatpush1.msra.mxu0 0.0
        %1291 = vmatprep.subr.mxu0 0.0
        %1292 = vmatpush1.msra.mxu0 0.0
        %1293 = vmatprep.subr.mxu0 0.0
        %1294 = vmatpush1.msra.mxu0 0.0
        %1295 = vmatprep.subr.mxu0 0.0
        %1296 = vmatpush1.msra.mxu0 0.0
        %1297 = vmatprep.subr.mxu0 0.0
        %1298 = vmatpush1.msra.mxu0 0.0
        %1299 = vmatprep.subr.mxu0 0.0
        %1300 = vmatpush1.msra.mxu0 0.0
        %1301 = vmatprep.subr.mxu0 0.0
        %1302 = vmatpush1.msra.mxu0 0.0
        %1303 = vmatprep.subr.mxu0 0.0
        %1304 = vmatpush1.msra.mxu0 0.0
        %1305 = vmatprep.subr.mxu0 0.0
        %1306 = vmatpush1.msra.mxu0 0.0
        %1307 = vmatprep.mubr.f32.mxu0 0.0
        %1308 = vmatmul.mubr.f32.gmra.mrb[0].mxu0 %v1241
        %v1309 = vpop.f32.mrb[0].mxu0
        %v1310 = vadd.f32 %v491, %v1309
        %v1311 = vpop.f32.mrb[0].mxu0
        %v1312 = vadd.f32 %v493, %v1311
        %1313 = vdwg.mxu0
        %v1314 = vxor.u32 %v1310, 2147483648
        %v1315 = vxor.u32 %v1312, 2147483648
        %v1316 = vmul.f32 %v1314, 1.442695
        %v1317 = vpow.pop %v1316
        %v1318 = vmul.f32 %v1315, 1.442695
        %v1319 = vpow.pop %v1318
        %v1320 = vadd.f32 %v1317, 1.0
        %v1321 = vadd.f32 %v1319, 1.0
        %v1322 = vrcp.pop %v1320
        %v1323 = vmul.f32 1.0, %v1322
        %v1324 = vrcp.pop %v1321
        %v1325 = vmul.f32 1.0, %v1324
        %v1326 = vtanh.pop %v1312
        %v1327 = vmul.f32 %v1323, %v1233
        %1329 = vrot.lane.b32.xlu0 %v1326, 64
        %v1330 = vpop.permute.xlu0 %1329
        %v1332 = vmul.f32 %v1323, %v1330
        %1334 = vrot.lane.b32.xlu0 %v1332, 64
        %v1335 = vpop.permute.xlu0 %1334
        %v1337 = vadd.f32 %v1327, %v1335
        %v1338 = vtanh.pop %v1337
        %1340 = vrot.lane.b32.xlu0 %v1338, 64
        %v1341 = vpop.permute.xlu0 %1340
        %v1343 = vmul.f32 %v1325, %v1341
        %vm1344 = vcmask 261120
        %v1345 = vsel %vm1344, %v615, %v1343
        %v1346 = vsel %vm1344, %v719, %v1239
        %v1347 = vsel %vm1344, %v823, %v1135
        %v1348 = vsel %vm1344, %v927, %v1031
        %v1349 = vsel %vm1344, %v1031, %v927
        %v1350 = vsel %vm1344, %v1135, %v823
        %v1351 = vsel %vm1344, %v1239, %v719
        %v1352 = vsel %vm1344, %v1343, %v615
        %v1353 = vld [vmem:[#allocation8] sm:$0xff]
        %v1354 = vld [vmem:[#allocation8 + $0x8] sm:$0xff]
        %v1355 = vld [vmem:[#allocation8 + $0x10] sm:$0xff]
        %v1356 = vld [vmem:[#allocation8 + $0x18] sm:$0xff]
        %v1357 = vld [vmem:[#allocation8 + $0x20] sm:$0xff]
        %v1358 = vld [vmem:[#allocation8 + $0x28] sm:$0xff]
        %v1359 = vld [vmem:[#allocation8 + $0x30] sm:$0xff]
        %v1360 = vld [vmem:[#allocation8 + $0x38] sm:$0xff]
        %v1361 = vld [vmem:[%s5] sm:$0x1]
        %v1363 = vlaneseq
        %v1364 = vshrl.u32 %v1363, 7
        %v1365 = vsub.s32 0, %v1364
        %v1366 = vrot.slane %v1361, %v1365
        %v1369 = vsel %vm511, %v1345, 0
        %v1372 = vsel %vm511, %v1346, 0
        %v1375 = vsel %vm511, %v1347, 0
        %v1378 = vsel %vm511, %v1348, 0
        %v1381 = vsel %vm511, %v1349, 0
        %v1384 = vsel %vm511, %v1350, 0
        %v1387 = vsel %vm511, %v1351, 0
        %v1390 = vsel %vm511, %v1352, 0
        %1392 = vmatprep.subr.mxu0 0.0
        %1393 = vmatpush1.msra.mxu0 %v1353
        %1394 = vmatprep.subr.mxu0 0.0
        %1395 = vmatpush1.msra.mxu0 %v1354
        %1396 = vmatprep.subr.mxu0 0.0
        %1397 = vmatpush1.msra.mxu0 %v1355
        %1398 = vmatprep.subr.mxu0 0.0
        %1399 = vmatpush1.msra.mxu0 %v1356
        %1400 = vmatprep.subr.mxu0 0.0
        %1401 = vmatpush1.msra.mxu0 %v1357
        %1402 = vmatprep.subr.mxu0 0.0
        %1403 = vmatpush1.msra.mxu0 %v1358
        %1404 = vmatprep.subr.mxu0 0.0
        %1405 = vmatpush1.msra.mxu0 %v1359
        %1406 = vmatprep.subr.mxu0 0.0
        %1407 = vmatpush1.msra.mxu0 %v1360
        %1408 = vmatprep.subr.mxu0 0.0
        %1409 = vmatpush1.msra.mxu0 0.0
        %1410 = vmatprep.subr.mxu0 0.0
        %1411 = vmatpush1.msra.mxu0 0.0
        %1412 = vmatprep.subr.mxu0 0.0
        %1413 = vmatpush1.msra.mxu0 0.0
        %1414 = vmatprep.subr.mxu0 0.0
        %1415 = vmatpush1.msra.mxu0 0.0
        %1416 = vmatprep.subr.mxu0 0.0
        %1417 = vmatpush1.msra.mxu0 0.0
        %1418 = vmatprep.subr.mxu0 0.0
        %1419 = vmatpush1.msra.mxu0 0.0
        %1420 = vmatprep.subr.mxu0 0.0
        %1421 = vmatpush1.msra.mxu0 0.0
        %1422 = vmatprep.subr.mxu0 0.0
        %1423 = vmatpush1.msra.mxu0 0.0
        %1424 = vmatprep.subr.mxu0 0.0
        %1425 = vmatpush1.msra.mxu0 0.0
        %1426 = vmatprep.subr.mxu0 0.0
        %1427 = vmatpush1.msra.mxu0 0.0
        %1428 = vmatprep.subr.mxu0 0.0
        %1429 = vmatpush1.msra.mxu0 0.0
        %1430 = vmatprep.subr.mxu0 0.0
        %1431 = vmatpush1.msra.mxu0 0.0
        %1432 = vmatprep.subr.mxu0 0.0
        %1433 = vmatpush1.msra.mxu0 0.0
        %1434 = vmatprep.subr.mxu0 0.0
        %1435 = vmatpush1.msra.mxu0 0.0
        %1436 = vmatprep.subr.mxu0 0.0
        %1437 = vmatpush1.msra.mxu0 0.0
        %1438 = vmatprep.subr.mxu0 0.0
        %1439 = vmatpush1.msra.mxu0 0.0
        %1440 = vmatprep.subr.mxu0 0.0
        %1441 = vmatpush1.msra.mxu0 0.0
        %1442 = vmatprep.subr.mxu0 0.0
        %1443 = vmatpush1.msra.mxu0 0.0
        %1444 = vmatprep.subr.mxu0 0.0
        %1445 = vmatpush1.msra.mxu0 0.0
        %1446 = vmatprep.subr.mxu0 0.0
        %1447 = vmatpush1.msra.mxu0 0.0
        %1448 = vmatprep.subr.mxu0 0.0
        %1449 = vmatpush1.msra.mxu0 0.0
        %1450 = vmatprep.subr.mxu0 0.0
        %1451 = vmatpush1.msra.mxu0 0.0
        %1452 = vmatprep.subr.mxu0 0.0
        %1453 = vmatpush1.msra.mxu0 0.0
        %1454 = vmatprep.subr.mxu0 0.0
        %1455 = vmatpush1.msra.mxu0 0.0
        %1456 = vmatprep.mubr.f32.mxu0 0.0
        %1457 = vmatmul.mubr.f32.gmra.mrb[0].mxu0 %v1369
        %v1458 = vpop.f32.mrb[0].mxu0
        %v1459 = vadd.f32 %v1366, %v1458
        %v1460 = vpop.f32.mrb[0].mxu0
        %1461 = vmatprep.mubr.f32.mxu0 0.0
        %1462 = vmatmul.mubr.f32.gmra.mrb[0].mxu0 %v1372
        %v1463 = vpop.f32.mrb[0].mxu0
        %v1464 = vadd.f32 %v1366, %v1463
        %v1465 = vpop.f32.mrb[0].mxu0
        %1466 = vmatprep.mubr.f32.mxu0 0.0
        %1467 = vmatmul.mubr.f32.gmra.mrb[0].mxu0 %v1375
        %v1468 = vpop.f32.mrb[0].mxu0
        %v1469 = vadd.f32 %v1366, %v1468
        %v1470 = vpop.f32.mrb[0].mxu0
        %1471 = vmatprep.mubr.f32.mxu0 0.0
        %1472 = vmatmul.mubr.f32.gmra.mrb[0].mxu0 %v1378
        %v1473 = vpop.f32.mrb[0].mxu0
        %v1474 = vadd.f32 %v1366, %v1473
        %v1475 = vpop.f32.mrb[0].mxu0
        %1476 = vmatprep.mubr.f32.mxu0 0.0
        %1477 = vmatmul.mubr.f32.gmra.mrb[0].mxu0 %v1381
        %v1478 = vpop.f32.mrb[0].mxu0
        %v1479 = vadd.f32 %v1366, %v1478
        %v1480 = vpop.f32.mrb[0].mxu0
        %1481 = vmatprep.mubr.f32.mxu0 0.0
        %1482 = vmatmul.mubr.f32.gmra.mrb[0].mxu0 %v1384
        %v1483 = vpop.f32.mrb[0].mxu0
        %v1484 = vadd.f32 %v1366, %v1483
        %v1485 = vpop.f32.mrb[0].mxu0
        %1486 = vmatprep.mubr.f32.mxu0 0.0
        %1487 = vmatmul.mubr.f32.gmra.mrb[0].mxu0 %v1387
        %v1488 = vpop.f32.mrb[0].mxu0
        %v1489 = vadd.f32 %v1366, %v1488
        %v1490 = vpop.f32.mrb[0].mxu0
        %1491 = vmatprep.mubr.f32.mxu0 0.0
        %1492 = vmatmul.mubr.f32.gmra.mrb[0].mxu0 %v1390
        %v1493 = vpop.f32.mrb[0].mxu0
        %v1494 = vadd.f32 %v1366, %v1493
        %v1495 = vpop.f32.mrb[0].mxu0
        %1496 = vdwg.mxu0
        %1497 = vmax.xlane.f32.xlu0 %v1459
        %v1498 = vpop.xlane.xlu0 %1497
        %1499 = vmax.xlane.f32.xlu0 %v1464
        %v1500 = vpop.xlane.xlu0 %1499
        %1501 = vmax.xlane.f32.xlu0 %v1469
        %v1502 = vpop.xlane.xlu0 %1501
        %1503 = vmax.xlane.f32.xlu0 %v1474
        %v1504 = vpop.xlane.xlu0 %1503
        %1505 = vmax.xlane.f32.xlu0 %v1479
        %v1506 = vpop.xlane.xlu0 %1505
        %1507 = vmax.xlane.f32.xlu0 %v1484
        %v1508 = vpop.xlane.xlu0 %1507
        %1509 = vmax.xlane.f32.xlu0 %v1489
        %v1510 = vpop.xlane.xlu0 %1509
        %1511 = vmax.xlane.f32.xlu0 %v1494
        %v1512 = vpop.xlane.xlu0 %1511
        %v1513 = vsub.f32 %v1459, %v1498
        %v1514 = vsub.f32 %v1464, %v1500
        %v1515 = vsub.f32 %v1469, %v1502
        %v1516 = vsub.f32 %v1474, %v1504
        %v1517 = vsub.f32 %v1479, %v1506
        %v1518 = vsub.f32 %v1484, %v1508
        %v1519 = vsub.f32 %v1489, %v1510
        %v1520 = vsub.f32 %v1494, %v1512
        %v1521 = vmul.f32 %v1513, 1.442695
        %v1522 = vpow.pop %v1521
        %v1523 = vmul.f32 %v1514, 1.442695
        %v1524 = vpow.pop %v1523
        %v1525 = vmul.f32 %v1515, 1.442695
        %v1526 = vpow.pop %v1525
        %v1527 = vmul.f32 %v1516, 1.442695
        %v1528 = vpow.pop %v1527
        %v1529 = vmul.f32 %v1517, 1.442695
        %v1530 = vpow.pop %v1529
        %v1531 = vmul.f32 %v1518, 1.442695
        %v1532 = vpow.pop %v1531
        %v1533 = vmul.f32 %v1519, 1.442695
        %v1534 = vpow.pop %v1533
        %v1535 = vmul.f32 %v1520, 1.442695
        %v1536 = vpow.pop %v1535
        %1537 = vadd.xlane.f32.xlu0 %v1522
        %v1538 = vpop.xlane.xlu0 %1537
        %1539 = vadd.xlane.f32.xlu0 %v1524
        %v1540 = vpop.xlane.xlu0 %1539
        %1541 = vadd.xlane.f32.xlu0 %v1526
        %v1542 = vpop.xlane.xlu0 %1541
        %1543 = vadd.xlane.f32.xlu0 %v1528
        %v1544 = vpop.xlane.xlu0 %1543
        %1545 = vadd.xlane.f32.xlu0 %v1530
        %v1546 = vpop.xlane.xlu0 %1545
        %1547 = vadd.xlane.f32.xlu0 %v1532
        %v1548 = vpop.xlane.xlu0 %1547
        %1549 = vadd.xlane.f32.xlu0 %v1534
        %v1550 = vpop.xlane.xlu0 %1549
        %1551 = vadd.xlane.f32.xlu0 %v1536
        %v1552 = vpop.xlane.xlu0 %1551
        %v1553 = vlog2.pop %v1538
        %v1554 = vmul.f32 %v1553, 0.6931472
        %v1555 = vlog2.pop %v1540
        %v1556 = vmul.f32 %v1555, 0.6931472
        %v1557 = vlog2.pop %v1542
        %v1558 = vmul.f32 %v1557, 0.6931472
        %v1559 = vlog2.pop %v1544
        %v1560 = vmul.f32 %v1559, 0.6931472
        %v1561 = vlog2.pop %v1546
        %v1562 = vmul.f32 %v1561, 0.6931472
        %v1563 = vlog2.pop %v1548
        %v1564 = vmul.f32 %v1563, 0.6931472
        %v1565 = vlog2.pop %v1550
        %v1566 = vmul.f32 %v1565, 0.6931472
        %v1567 = vlog2.pop %v1552
        %v1568 = vmul.f32 %v1567, 0.6931472
        %v1569 = vadd.f32 %v1554, %v1498
        %v1570 = vadd.f32 %v1556, %v1500
        %v1571 = vadd.f32 %v1558, %v1502
        %v1572 = vadd.f32 %v1560, %v1504
        %v1573 = vadd.f32 %v1562, %v1506
        %v1574 = vadd.f32 %v1564, %v1508
        %v1575 = vadd.f32 %v1566, %v1510
        %v1576 = vadd.f32 %v1568, %v1512
        %v1577 = vsub.f32 %v1459, %v1569
        %v1578 = vsub.f32 %v1464, %v1570
        %v1579 = vsub.f32 %v1469, %v1571
        %v1580 = vsub.f32 %v1474, %v1572
        %v1581 = vsub.f32 %v1479, %v1573
        %v1582 = vsub.f32 %v1484, %v1574
        %v1583 = vsub.f32 %v1489, %v1575
        %v1584 = vsub.f32 %v1494, %v1576
        %1585 = vst [vmem:[%s312] sm:$0xff] %v1577
        %1586 = vst [vmem:[%s312 + $0x8] sm:$0xff] %v1578
        %1587 = vst [vmem:[%s312 + $0x10] sm:$0xff] %v1579
        %1588 = vst [vmem:[%s312 + $0x18] sm:$0xff] %v1580
        %1589 = vst [vmem:[%s312 + $0x20] sm:$0xff] %v1581
        %1590 = vst [vmem:[%s312 + $0x28] sm:$0xff] %v1582
        %1591 = vst [vmem:[%s312 + $0x30] sm:$0xff] %v1583
        %1592 = vst [vmem:[%s312 + $0x38] sm:$0xff] %v1584
        %s1593 = sand.u32 %s164, 1
        %s1594 = scalar_lea.sflag [#allocation4], %s1593
        %s1595 = sand.u32 %s164, 1
        %s1596 = smul.addr %s1595, 64
        %s1597 = scalar_lea.vmem [#allocation10], %s1596
        // Predicated region
        $region61: #{tpu_custom_call.1} parent=43 // pred_check
          %p1598 = pneg %p174
        $region62: #{tpu_custom_call.1} parent=43 // pred_check_branch
          %1600 = sbr.rel (%p1598) target = $region64
        $region63: #{tpu_custom_call.1} parent=43 // pred_region
          %s1602 = ssub.s32 1024, 1024
          %1603 = vsyncadd %s1594, %s1602
          %s1604 = smul.addr %s25, 128
          %s1605 = scalar_lea.hbm %s6, %s1604
          %s1606 = sshll.u32 %s1597, 4
          %s1607 = int_to_ptr.vmem [resolvable:$true] %s1606
          %1612 = dma.vmem_to_hbm [thread:$0]  %s1607, 1024, %s1605, %s1594, 128, 256, 8
        $region64: #{tpu_custom_call.1} parent=43 // pred_fallthru
          _
      $region44: #{tpu_custom_call.1} parent=5 // pred_fallthru
        _
      %p1613 = scmp.le.s32.totalorder 2, %s20
      // Predicated region
      $region65: #{tpu_custom_call.1} parent=5 // pred_check
        %p1614 = pneg %p1613
      $region66: #{tpu_custom_call.1} parent=5 // pred_check_branch
        %1616 = sbr.rel (%p1614) target = $region68
      $region67: #{tpu_custom_call.1} parent=5 // pred_region
        %s1617 = ssub.s32 %s20, 2
        // Predicated region
        $region69: #{tpu_custom_call.1} parent=67 // pred_check
          %p1618 = pneg %p180
        $region70: #{tpu_custom_call.1} parent=67 // pred_check_branch
          %1620 = sbr.rel (%p1618) target = $region72
        $region71: #{tpu_custom_call.1} parent=67 // pred_region
          %s1621 = sand.u32 %s165, 1
          %s1622 = scalar_lea.sflag [#allocation4], %s1621
          %s1623 = sand.u32 %s165, 1
          %s1624 = smul.addr %s1623, 64
          %s1625 = scalar_lea.vmem [#allocation10], %s1624
          %1626 = dma.done %s1622, 1024
        $region72: #{tpu_custom_call.1} parent=67 // pred_fallthru
          _
      $region68: #{tpu_custom_call.1} parent=5 // pred_fallthru
        _
    $region6: #{tpu_custom_call.1} parent=1 // loop_footer
      %s24 = sadd.s32 1, %s20
    $region7: #{tpu_custom_call.1} parent=1 // loop_footer_branch
      %19 = sbr.rel target = $region3
    $region8: #{tpu_custom_call.1} parent=1 // loop_exit
      _
    %1627 = vsyncpa [#allocation3], 1
    %s1628 = scalar_lea.sflag [#allocation3], 1
    %1629 = vsyncpa %s1628, 1
    %1630 = vsyncpa [#allocation6], 1
    %1631 = vsyncpa [#allocation9], 1
    %1632 = vsyncpa [#allocation4], 1
    %s1633 = scalar_lea.sflag [#allocation4], 1
    %1634 = vsyncpa %s1633, 1

</llo_original>
